<compile_context>
chip_gen: v7x
topology: tpu7x:2x2x1
jax: 0.10.0
libtpu: 0.0.40
codegen_flags: <defaults>
</compile_context>

<pallas_src>
import functools

import jax
import jax.numpy as jnp
import numpy as np
from jax import lax
from jax.experimental import pallas as pl
from jax.experimental.pallas import tpu as pltpu


def _fused_downsample_kernel(xp_ref, w1_ref, w2_ref, mask_ref, alpha_ref,
                             out_ref, *, Wo):
    # xp_ref   : (4, C, L)   parity planes of x; plane index = ph*2 + pw,
    #                        lane l = n*Q + ho*Wo + wo (zero padded to L)
    # w1_ref   : (9, C, C)   conv1 weights, [kh*3+kw, cout, cin]
    # w2_ref   : (2C, C)     conv2 (1x1) weights
    # mask_ref : (4, L) f32  0/1 lane masks: [ho>=1, ho<=Ho-2, wo>=1, wo<=Wo-2]
    # alpha_ref: (1, 1) SMEM PReLU slope
    # out_ref  : (2C, L) f32 lane-dense output, same lane order as xp
    C = xp_ref.shape[1]
    L = xp_ref.shape[2]
    cdt = xp_ref.dtype

    planes = [xp_ref[i] for i in range(4)]            # 4 x (C, L)

    # ---- masks: broadcasts / complements / corner products hoisted (once) --
    mk = mask_ref[...]                                 # (4, L) f32

    def mrow(i, dt):
        return jnp.broadcast_to(mk[i:i + 1, :], (C, L)).astype(dt)

    ho_ge1_c, ho_le_c = mrow(0, cdt), mrow(1, cdt)
    wo_ge1_c, wo_le_c = mrow(2, cdt), mrow(3, cdt)
    ho_ge1_f, wo_ge1_f = mrow(0, jnp.float32), mrow(2, jnp.float32)
    ho_lt1_f = 1.0 - ho_ge1_f
    wo_lt1_f = 1.0 - wo_ge1_f

    mh = {-1: ho_ge1_c, 0: None, 1: ho_le_c}
    mw = {-1: wo_ge1_c, 0: None, 1: wo_le_c}
    tap_mask = {}
    for bh in (-1, 0, 1):
        for bw in (-1, 0, 1):
            a, b = mh[bh], mw[bw]
            if a is None:
                tap_mask[(bh, bw)] = b
            elif b is None:
                tap_mask[(bh, bw)] = a
            else:
                tap_mask[(bh, bw)] = a * b

    def roll_lanes(a, k):
        # result[:, l] = a[:, (l + k) % L]   (static k; XLU lane rotate)
        r = (-k) % L
        return a if r == 0 else pltpu.roll(a, shift=r, axis=1)

    def split(par, d):
        s = par + d                  # in {-1, 0, 1, 2}
        p = s & 1                    # source parity plane
        return p, (s - p) // 2       # parity-plane shift in {-1, 0, 1}

    tap_cache = {}

    def tap(par_h, bh, par_w, bw):
        # x[c, 2*(ho+bh)+par_h, 2*(wo+bw)+par_w], zeroed when out of bounds
        # (the masks also kill every lane whose roll wrapped across a batch
        # or into the zero-padded tail, so folding N into lanes is safe).
        key = (par_h, bh, par_w, bw)
        if key not in tap_cache:
            a = roll_lanes(planes[par_h * 2 + par_w], bh * Wo + bw)
            m = tap_mask[(bh, bw)]
            tap_cache[key] = a if m is None else a * m
        return tap_cache[key]

    # ---- conv1 3x3 (zero pad): 9 accumulated (C,C)@(C,4L) MXU matmuls ------
    # Columns: 4 output-parity segments (ee, eo, oe, oo), each L lanes,
    # 128-aligned.  f32 accumulation; live values bounded to one tap RHS.
    acc = jnp.zeros((C, 4 * L), jnp.float32)
    for dh in (-1, 0, 1):
        for dw in (-1, 0, 1):
            t_idx = (dh + 1) * 3 + (dw + 1)
            cols = []
            for ph in (0, 1):
                for pw in (0, 1):
                    par_h, bh = split(ph, dh)
                    par_w, bw = split(pw, dw)
                    cols.append(tap(par_h, bh, par_w, bw))
            rhs = jnp.concatenate(cols, axis=1)                 # (C, 4L)
            acc = acc + jnp.dot(w1_ref[t_idx], rhs,
                                preferred_element_type=jnp.float32)

    # ---- PReLU (f32) -------------------------------------------------------
    alpha = alpha_ref[0, 0]
    y = jnp.where(acc > 0, acc, alpha * acc)                    # (C, 4L) f32

    y_ee = y[:, 0 * L:1 * L]     # conv1+PReLU: even rows, even cols
    y_eo = y[:, 1 * L:2 * L]     # even rows, odd cols
    y_oe = y[:, 2 * L:3 * L]     # odd rows, even cols
    y_oo = y[:, 3 * L:4 * L]     # odd rows, odd cols

    # ---- ReflectionPad2d(1) + [1,2,1]x[1,2,1]/16 blur + stride-2 down ------
    def left(a):   # a[ho, wo-1]; reflected (-> a[ho, 0]) at wo == 0
        return a * wo_lt1_f + roll_lanes(a, -1) * wo_ge1_f

    def up(a):     # a[ho-1, wo]; reflected (-> a[0, wo]) at ho == 0
        return a * ho_lt1_f + roll_lanes(a, -Wo) * ho_ge1_f

    oo_l = left(y_oo)
    z = (4.0 * y_ee
         + 2.0 * (left(y_eo) + y_eo)
         + 2.0 * (up(y_oe) + y_oe)
         + up(oo_l) + up(y_oo) + oo_l + y_oo) * (1.0 / 16.0)    # (C, L) f32

    # ---- conv2 1x1: lane-dense, unmasked (2C, L) store ---------------------
    out = jnp.dot(w2_ref[...], z.astype(cdt),
                  preferred_element_type=jnp.float32)
    out_ref[...] = out.astype(out_ref.dtype)


def downsample_forward(x_nchw, w1, alpha, w2, *, compute_dtype=jnp.bfloat16):
    """DownSample.forward: (N, C, H, W) f32 -> (N, 2C, H//2, W//2) f32."""
    N, C, H, W = x_nchw.shape
    assert H % 2 == 0 and W % 2 == 0, "even spatial dims expected"
    Ho, Wo = H // 2, W // 2
    Q = Ho * Wo
    L = ((N * Q + 127) // 128) * 128        # folded, 128-aligned lane axis

    x = x_nchw.astype(jnp.float32)
    # Parity split (the only wrapper-side data movement; XLA may fuse it into
    # the pallas_call input via allow_input_fusion):
    #   xp[ph*2+pw, c, n*Q + ho*Wo + wo] = x[n, c, 2*ho+ph, 2*wo+pw]
    xp = jnp.transpose(x.reshape(N, C, Ho, 2, Wo, 2),
                       (3, 5, 1, 0, 2, 4)).reshape(4, C, N * Q)
    xp = xp.astype(compute_dtype)
    if L != N * Q:
        xp = jnp.pad(xp, ((0, 0), (0, 0), (0, L - N * Q)))

    # conv1 weight (Cout, Cin, 3, 3) -> (9, Cout, Cin); conv2 -> (2C, C).
    w1t = jnp.transpose(w1, (2, 3, 0, 1)).reshape(9, C, C).astype(compute_dtype)
    w2m = w2.reshape(2 * C, C).astype(compute_dtype)
    alpha_arr = jnp.asarray(alpha, jnp.float32).reshape(1, 1)

    # 0/1 border masks per folded lane l = n*Q + ho*Wo + wo (0 on pad lanes).
    lane = jnp.arange(L, dtype=jnp.int32)
    q = lane % Q
    ho_l, wo_l = q // Wo, q % Wo
    valid = lane < N * Q
    masks = (jnp.stack([ho_l >= 1, ho_l <= Ho - 2,
                        wo_l >= 1, wo_l <= Wo - 2])
             & valid[None, :]).astype(jnp.float32)               # (4, L)

    itemsize = jnp.dtype(compute_dtype).itemsize
    flops = (2 * C * (9 * C) * (4 * L)        # conv1 (9 accumulated matmuls)
             + 2 * (2 * C) * C * L            # conv2
             + 64 * C * L)                    # PReLU + blur + masking (VPU)
    bytes_accessed = ((xp.size + w1t.size + w2m.size) * itemsize
                      + masks.size * 4 + 4 + 2 * C * L * 4)
    cost = pl.CostEstimate(flops=flops, transcendentals=0,
                           bytes_accessed=bytes_accessed)

    kernel = functools.partial(_fused_downsample_kernel, Wo=Wo)

    out_flat = pl.pallas_call(
        kernel,
        out_shape=jax.ShapeDtypeStruct((2 * C, L), jnp.float32),
        in_specs=[
            pl.BlockSpec(memory_space=pltpu.MemorySpace.VMEM),   # xp planes
            pl.BlockSpec(memory_space=pltpu.MemorySpace.VMEM),   # conv1 w
            pl.BlockSpec(memory_space=pltpu.MemorySpace.VMEM),   # conv2 w
            pl.BlockSpec(memory_space=pltpu.MemorySpace.VMEM),   # lane masks
            pl.BlockSpec(memory_space=pltpu.MemorySpace.SMEM),   # PReLU slope
        ],
        out_specs=pl.BlockSpec(memory_space=pltpu.MemorySpace.VMEM),
        compiler_params=pltpu.CompilerParams(
            # Let XLA fuse the xp parity-split producer into the kernel input;
            # the remaining operands are tiny.  VMEM use here is <1 MiB, so
            # the default scoped limit is plenty (at scale: add a "parallel"
            # Q-tiling grid axis + set vmem_limit_bytes, esp. on v7x/64 MiB).
            allow_input_fusion=[True, False, False, False, False]),
        cost_estimate=cost,
    )(xp, w1t, w2m, masks, alpha_arr)

    # Lane axis is n-major -> cheap de-fold; the output tensor itself is tiny.
    out = out_flat[:, :N * Q].reshape(2 * C, N, Ho, Wo)
    return jnp.transpose(out, (1, 0, 2, 3))


def reference_forward(x, w1, alpha, w2):
    """Pure-JAX reference matching the PyTorch module semantics (NCHW)."""
    dn = ("NCHW", "OIHW", "NCHW")
    C = x.shape[1]
    y = lax.conv_general_dilated(x, w1, (1, 1), ((1, 1), (1, 1)),
                                 dimension_numbers=dn)
    y = jnp.where(y > 0, y, alpha * y)                                # PReLU
    ypad = jnp.pad(y, ((0, 0), (0, 0), (1, 1), (1, 1)), mode="reflect")
    a = jnp.array([1.0, 2.0, 1.0], jnp.float32)
    filt = jnp.outer(a, a) / 16.0
    dw_filt = jnp.tile(filt[None, None], (C, 1, 1, 1))                # (C,1,3,3)
    z = lax.conv_general_dilated(ypad, dw_filt, (2, 2), "VALID",
                                 dimension_numbers=dn, feature_group_count=C)
    return lax.conv_general_dilated(z, w2, (1, 1), "VALID",
                                    dimension_numbers=dn)


if __name__ == "__main__":
    key = jax.random.PRNGKey(0)
    k1, k2, k3 = jax.random.split(key, 3)

    N, C, H, W = 2, 4, 16, 16                     # in_channel=4, spatial 16x16
    x = jax.random.normal(k1, (N, C, H, W), jnp.float32)
    # deterministic synthetic parameters (module __init__ shapes, bias=False)
    w1 = jax.random.normal(k2, (C, C, 3, 3), jnp.float32) * 0.1      # conv1
    w2 = jax.random.normal(k3, (2 * C, C, 1, 1), jnp.float32) * 0.1  # conv2
    alpha = jnp.float32(0.25)                                        # PReLU

    ref = reference_forward(x, w1, alpha, w2)

    # Exact-precision path (f32 MXU operands): validates the fused math.
    out_f32 = jax.jit(functools.partial(downsample_forward,
                                        compute_dtype=jnp.float32))(
        x, w1, alpha, w2)
    out_f32 = jax.block_until_ready(out_f32)
    assert out_f32.shape == (N, 2 * C, H // 2, W // 2), out_f32.shape
    np.testing.assert_allclose(np.asarray(out_f32), np.asarray(ref),
                               rtol=1e-4, atol=1e-4)

    # Fast path (default): bf16 MXU operands, f32 accumulation / blur.
    out_bf16 = jax.jit(downsample_forward)(x, w1, alpha, w2)
    out_bf16 = jax.block_until_ready(out_bf16)
    assert out_bf16.shape == (N, 2 * C, H // 2, W // 2), out_bf16.shape
    np.testing.assert_allclose(np.asarray(out_bf16), np.asarray(ref),
                               rtol=5e-2, atol=5e-2)

    print("KERNEL_OK")
</pallas_src>

<mosaic_0001>
module attributes {stable_mosaic.version = 11 : i64} {
  func.func @_fused_downsample_kernel(%arg0: memref<4x4x128xf32, #tpu.memory_space<vmem>>, %arg1: memref<9x4x4xf32, #tpu.memory_space<vmem>>, %arg2: memref<8x4xf32, #tpu.memory_space<vmem>>, %arg3: memref<4x128xf32, #tpu.memory_space<vmem>>, %arg4: memref<1x1xf32, #tpu.memory_space<smem>>, %arg5: memref<8x128xf32, #tpu.memory_space<vmem>>) attributes {dimension_semantics = [], scalar_prefetch = 0 : i64, scratch_operands = 0 : i64, tpu.core_type = #tpu.core_type<tc>} {
    %c0 = arith.constant 0 : index
    %c0_0 = arith.constant 0 : index
    %c0_1 = arith.constant 0 : index
    %0 = vector.load %arg0[%c0, %c0_0, %c0_1] : memref<4x4x128xf32, #tpu.memory_space<vmem>>, vector<1x4x128xf32>
    %1 = vector.shape_cast %0 : vector<1x4x128xf32> to vector<4x128xf32>
    %c1 = arith.constant 1 : index
    %c0_2 = arith.constant 0 : index
    %c0_3 = arith.constant 0 : index
    %2 = vector.load %arg0[%c1, %c0_2, %c0_3] : memref<4x4x128xf32, #tpu.memory_space<vmem>>, vector<1x4x128xf32>
    %3 = vector.shape_cast %2 : vector<1x4x128xf32> to vector<4x128xf32>
    %c2 = arith.constant 2 : index
    %c0_4 = arith.constant 0 : index
    %c0_5 = arith.constant 0 : index
    %4 = vector.load %arg0[%c2, %c0_4, %c0_5] : memref<4x4x128xf32, #tpu.memory_space<vmem>>, vector<1x4x128xf32>
    %5 = vector.shape_cast %4 : vector<1x4x128xf32> to vector<4x128xf32>
    %c3 = arith.constant 3 : index
    %c0_6 = arith.constant 0 : index
    %c0_7 = arith.constant 0 : index
    %6 = vector.load %arg0[%c3, %c0_6, %c0_7] : memref<4x4x128xf32, #tpu.memory_space<vmem>>, vector<1x4x128xf32>
    %7 = vector.shape_cast %6 : vector<1x4x128xf32> to vector<4x128xf32>
    %c0_8 = arith.constant 0 : index
    %c0_9 = arith.constant 0 : index
    %8 = vector.load %arg3[%c0_8, %c0_9] : memref<4x128xf32, #tpu.memory_space<vmem>>, vector<4x128xf32>
    %9 = vector.extract_strided_slice %8 {offsets = [0, 0], sizes = [1, 128], strides = [1, 1]} : vector<4x128xf32> to vector<1x128xf32>
    %10 = vector.shape_cast %9 : vector<1x128xf32> to vector<1x128xf32>
    %11 = vector.broadcast %10 : vector<1x128xf32> to vector<4x128xf32>
    %12 = vector.extract_strided_slice %8 {offsets = [1, 0], sizes = [1, 128], strides = [1, 1]} : vector<4x128xf32> to vector<1x128xf32>
    %13 = vector.shape_cast %12 : vector<1x128xf32> to vector<1x128xf32>
    %14 = vector.broadcast %13 : vector<1x128xf32> to vector<4x128xf32>
    %15 = vector.extract_strided_slice %8 {offsets = [2, 0], sizes = [1, 128], strides = [1, 1]} : vector<4x128xf32> to vector<1x128xf32>
    %16 = vector.shape_cast %15 : vector<1x128xf32> to vector<1x128xf32>
    %17 = vector.broadcast %16 : vector<1x128xf32> to vector<4x128xf32>
    %18 = vector.extract_strided_slice %8 {offsets = [3, 0], sizes = [1, 128], strides = [1, 1]} : vector<4x128xf32> to vector<1x128xf32>
    %19 = vector.shape_cast %18 : vector<1x128xf32> to vector<1x128xf32>
    %20 = vector.broadcast %19 : vector<1x128xf32> to vector<4x128xf32>
    %21 = vector.extract_strided_slice %8 {offsets = [0, 0], sizes = [1, 128], strides = [1, 1]} : vector<4x128xf32> to vector<1x128xf32>
    %22 = vector.shape_cast %21 : vector<1x128xf32> to vector<1x128xf32>
    %23 = vector.broadcast %22 : vector<1x128xf32> to vector<4x128xf32>
    %24 = vector.extract_strided_slice %8 {offsets = [2, 0], sizes = [1, 128], strides = [1, 1]} : vector<4x128xf32> to vector<1x128xf32>
    %25 = vector.shape_cast %24 : vector<1x128xf32> to vector<1x128xf32>
    %26 = vector.broadcast %25 : vector<1x128xf32> to vector<4x128xf32>
    %cst = arith.constant 1.000000e+00 : f32
    %27 = vector.broadcast %cst : f32 to vector<4x128xf32>
    %28 = arith.subf %27, %23 : vector<4x128xf32>
    %cst_10 = arith.constant 1.000000e+00 : f32
    %29 = vector.broadcast %cst_10 : f32 to vector<4x128xf32>
    %30 = arith.subf %29, %26 : vector<4x128xf32>
    %31 = arith.mulf %11, %17 : vector<4x128xf32>
    %32 = arith.mulf %11, %20 : vector<4x128xf32>
    %33 = arith.mulf %14, %17 : vector<4x128xf32>
    %34 = arith.mulf %14, %20 : vector<4x128xf32>
    %cst_11 = arith.constant 0.000000e+00 : f32
    %35 = vector.broadcast %cst_11 : f32 to vector<4x512xf32>
    %c9_i32 = arith.constant 9 : i32
    %36 = tpu.dynamic_rotate %7 by %c9_i32 dim 1 : vector<4x128xf32>, i32 -> vector<4x128xf32>
    %37 = arith.mulf %36, %31 : vector<4x128xf32>
    %c8_i32 = arith.constant 8 : i32
    %38 = tpu.dynamic_rotate %5 by %c8_i32 dim 1 : vector<4x128xf32>, i32 -> vector<4x128xf32>
    %39 = arith.mulf %38, %11 : vector<4x128xf32>
    %c1_i32 = arith.constant 1 : i32
    %40 = tpu.dynamic_rotate %3 by %c1_i32 dim 1 : vector<4x128xf32>, i32 -> vector<4x128xf32>
    %41 = arith.mulf %40, %17 : vector<4x128xf32>
    %42 = tpu.concatenate %37, %39, %41, %1 in 1 : vector<4x128xf32>, vector<4x128xf32>, vector<4x128xf32>, vector<4x128xf32> -> vector<4x512xf32>
    %c0_12 = arith.constant 0 : index
    %c0_13 = arith.constant 0 : index
    %c0_14 = arith.constant 0 : index
    %43 = vector.load %arg1[%c0_12, %c0_13, %c0_14] : memref<9x4x4xf32, #tpu.memory_space<vmem>>, vector<1x4x4xf32>
    %44 = vector.shape_cast %43 : vector<1x4x4xf32> to vector<4x4xf32>
    %cst_15 = arith.constant dense<0.000000e+00> : vector<4x512xf32>
    %45 = tpu.matmul %44, %42, %cst_15 {dimension_numbers = #tpu.dot_dimension_numbers<[1], [0], [0], [1], [0, 0, 1, 1], [], []>} : vector<4x4xf32>, vector<4x512xf32>, vector<4x512xf32> -> vector<4x512xf32>
    %46 = arith.addf %35, %45 : vector<4x512xf32>
    %c8_i32_16 = arith.constant 8 : i32
    %47 = tpu.dynamic_rotate %7 by %c8_i32_16 dim 1 : vector<4x128xf32>, i32 -> vector<4x128xf32>
    %48 = arith.mulf %47, %11 : vector<4x128xf32>
    %49 = tpu.concatenate %39, %48, %1, %3 in 1 : vector<4x128xf32>, vector<4x128xf32>, vector<4x128xf32>, vector<4x128xf32> -> vector<4x512xf32>
    %c1_17 = arith.constant 1 : index
    %c0_18 = arith.constant 0 : index
    %c0_19 = arith.constant 0 : index
    %50 = vector.load %arg1[%c1_17, %c0_18, %c0_19] : memref<9x4x4xf32, #tpu.memory_space<vmem>>, vector<1x4x4xf32>
    %51 = vector.shape_cast %50 : vector<1x4x4xf32> to vector<4x4xf32>
    %cst_20 = arith.constant dense<0.000000e+00> : vector<4x512xf32>
    %52 = tpu.matmul %51, %49, %cst_20 {dimension_numbers = #tpu.dot_dimension_numbers<[1], [0], [0], [1], [0, 0, 1, 1], [], []>} : vector<4x4xf32>, vector<4x512xf32>, vector<4x512xf32> -> vector<4x512xf32>
    %53 = arith.addf %46, %52 : vector<4x512xf32>
    %c7_i32 = arith.constant 7 : i32
    %54 = tpu.dynamic_rotate %5 by %c7_i32 dim 1 : vector<4x128xf32>, i32 -> vector<4x128xf32>
    %55 = arith.mulf %54, %32 : vector<4x128xf32>
    %c127_i32 = arith.constant 127 : i32
    %56 = tpu.dynamic_rotate %1 by %c127_i32 dim 1 : vector<4x128xf32>, i32 -> vector<4x128xf32>
    %57 = arith.mulf %56, %20 : vector<4x128xf32>
    %58 = tpu.concatenate %48, %55, %3, %57 in 1 : vector<4x128xf32>, vector<4x128xf32>, vector<4x128xf32>, vector<4x128xf32> -> vector<4x512xf32>
    %c2_21 = arith.constant 2 : index
    %c0_22 = arith.constant 0 : index
    %c0_23 = arith.constant 0 : index
    %59 = vector.load %arg1[%c2_21, %c0_22, %c0_23] : memref<9x4x4xf32, #tpu.memory_space<vmem>>, vector<1x4x4xf32>
    %60 = vector.shape_cast %59 : vector<1x4x4xf32> to vector<4x4xf32>
    %cst_24 = arith.constant dense<0.000000e+00> : vector<4x512xf32>
    %61 = tpu.matmul %60, %58, %cst_24 {dimension_numbers = #tpu.dot_dimension_numbers<[1], [0], [0], [1], [0, 0, 1, 1], [], []>} : vector<4x4xf32>, vector<4x512xf32>, vector<4x512xf32> -> vector<4x512xf32>
    %62 = arith.addf %53, %61 : vector<4x512xf32>
    %c1_i32_25 = arith.constant 1 : i32
    %63 = tpu.dynamic_rotate %7 by %c1_i32_25 dim 1 : vector<4x128xf32>, i32 -> vector<4x128xf32>
    %64 = arith.mulf %63, %17 : vector<4x128xf32>
    %65 = tpu.concatenate %41, %1, %64, %5 in 1 : vector<4x128xf32>, vector<4x128xf32>, vector<4x128xf32>, vector<4x128xf32> -> vector<4x512xf32>
    %c3_26 = arith.constant 3 : index
    %c0_27 = arith.constant 0 : index
    %c0_28 = arith.constant 0 : index
    %66 = vector.load %arg1[%c3_26, %c0_27, %c0_28] : memref<9x4x4xf32, #tpu.memory_space<vmem>>, vector<1x4x4xf32>
    %67 = vector.shape_cast %66 : vector<1x4x4xf32> to vector<4x4xf32>
    %cst_29 = arith.constant dense<0.000000e+00> : vector<4x512xf32>
    %68 = tpu.matmul %67, %65, %cst_29 {dimension_numbers = #tpu.dot_dimension_numbers<[1], [0], [0], [1], [0, 0, 1, 1], [], []>} : vector<4x4xf32>, vector<4x512xf32>, vector<4x512xf32> -> vector<4x512xf32>
    %69 = arith.addf %62, %68 : vector<4x512xf32>
    %70 = tpu.concatenate %1, %3, %5, %7 in 1 : vector<4x128xf32>, vector<4x128xf32>, vector<4x128xf32>, vector<4x128xf32> -> vector<4x512xf32>
    %c4 = arith.constant 4 : index
    %c0_30 = arith.constant 0 : index
    %c0_31 = arith.constant 0 : index
    %71 = vector.load %arg1[%c4, %c0_30, %c0_31] : memref<9x4x4xf32, #tpu.memory_space<vmem>>, vector<1x4x4xf32>
    %72 = vector.shape_cast %71 : vector<1x4x4xf32> to vector<4x4xf32>
    %cst_32 = arith.constant dense<0.000000e+00> : vector<4x512xf32>
    %73 = tpu.matmul %72, %70, %cst_32 {dimension_numbers = #tpu.dot_dimension_numbers<[1], [0], [0], [1], [0, 0, 1, 1], [], []>} : vector<4x4xf32>, vector<4x512xf32>, vector<4x512xf32> -> vector<4x512xf32>
    %74 = arith.addf %69, %73 : vector<4x512xf32>
    %c127_i32_33 = arith.constant 127 : i32
    %75 = tpu.dynamic_rotate %5 by %c127_i32_33 dim 1 : vector<4x128xf32>, i32 -> vector<4x128xf32>
    %76 = arith.mulf %75, %20 : vector<4x128xf32>
    %77 = tpu.concatenate %3, %57, %7, %76 in 1 : vector<4x128xf32>, vector<4x128xf32>, vector<4x128xf32>, vector<4x128xf32> -> vector<4x512xf32>
    %c5 = arith.constant 5 : index
    %c0_34 = arith.constant 0 : index
    %c0_35 = arith.constant 0 : index
    %78 = vector.load %arg1[%c5, %c0_34, %c0_35] : memref<9x4x4xf32, #tpu.memory_space<vmem>>, vector<1x4x4xf32>
    %79 = vector.shape_cast %78 : vector<1x4x4xf32> to vector<4x4xf32>
    %cst_36 = arith.constant dense<0.000000e+00> : vector<4x512xf32>
    %80 = tpu.matmul %79, %77, %cst_36 {dimension_numbers = #tpu.dot_dimension_numbers<[1], [0], [0], [1], [0, 0, 1, 1], [], []>} : vector<4x4xf32>, vector<4x512xf32>, vector<4x512xf32> -> vector<4x512xf32>
    %81 = arith.addf %74, %80 : vector<4x512xf32>
    %c121_i32 = arith.constant 121 : i32
    %82 = tpu.dynamic_rotate %3 by %c121_i32 dim 1 : vector<4x128xf32>, i32 -> vector<4x128xf32>
    %83 = arith.mulf %82, %33 : vector<4x128xf32>
    %c120_i32 = arith.constant 120 : i32
    %84 = tpu.dynamic_rotate %1 by %c120_i32 dim 1 : vector<4x128xf32>, i32 -> vector<4x128xf32>
    %85 = arith.mulf %84, %14 : vector<4x128xf32>
    %86 = tpu.concatenate %64, %5, %83, %85 in 1 : vector<4x128xf32>, vector<4x128xf32>, vector<4x128xf32>, vector<4x128xf32> -> vector<4x512xf32>
    %c6 = arith.constant 6 : index
    %c0_37 = arith.constant 0 : index
    %c0_38 = arith.constant 0 : index
    %87 = vector.load %arg1[%c6, %c0_37, %c0_38] : memref<9x4x4xf32, #tpu.memory_space<vmem>>, vector<1x4x4xf32>
    %88 = vector.shape_cast %87 : vector<1x4x4xf32> to vector<4x4xf32>
    %cst_39 = arith.constant dense<0.000000e+00> : vector<4x512xf32>
    %89 = tpu.matmul %88, %86, %cst_39 {dimension_numbers = #tpu.dot_dimension_numbers<[1], [0], [0], [1], [0, 0, 1, 1], [], []>} : vector<4x4xf32>, vector<4x512xf32>, vector<4x512xf32> -> vector<4x512xf32>
    %90 = arith.addf %81, %89 : vector<4x512xf32>
    %c120_i32_40 = arith.constant 120 : i32
    %91 = tpu.dynamic_rotate %3 by %c120_i32_40 dim 1 : vector<4x128xf32>, i32 -> vector<4x128xf32>
    %92 = arith.mulf %91, %14 : vector<4x128xf32>
    %93 = tpu.concatenate %5, %7, %85, %92 in 1 : vector<4x128xf32>, vector<4x128xf32>, vector<4x128xf32>, vector<4x128xf32> -> vector<4x512xf32>
    %c7 = arith.constant 7 : index
    %c0_41 = arith.constant 0 : index
    %c0_42 = arith.constant 0 : index
    %94 = vector.load %arg1[%c7, %c0_41, %c0_42] : memref<9x4x4xf32, #tpu.memory_space<vmem>>, vector<1x4x4xf32>
    %95 = vector.shape_cast %94 : vector<1x4x4xf32> to vector<4x4xf32>
    %cst_43 = arith.constant dense<0.000000e+00> : vector<4x512xf32>
    %96 = tpu.matmul %95, %93, %cst_43 {dimension_numbers = #tpu.dot_dimension_numbers<[1], [0], [0], [1], [0, 0, 1, 1], [], []>} : vector<4x4xf32>, vector<4x512xf32>, vector<4x512xf32> -> vector<4x512xf32>
    %97 = arith.addf %90, %96 : vector<4x512xf32>
    %c119_i32 = arith.constant 119 : i32
    %98 = tpu.dynamic_rotate %1 by %c119_i32 dim 1 : vector<4x128xf32>, i32 -> vector<4x128xf32>
    %99 = arith.mulf %98, %34 : vector<4x128xf32>
    %100 = tpu.concatenate %7, %76, %92, %99 in 1 : vector<4x128xf32>, vector<4x128xf32>, vector<4x128xf32>, vector<4x128xf32> -> vector<4x512xf32>
    %c8 = arith.constant 8 : index
    %c0_44 = arith.constant 0 : index
    %c0_45 = arith.constant 0 : index
    %101 = vector.load %arg1[%c8, %c0_44, %c0_45] : memref<9x4x4xf32, #tpu.memory_space<vmem>>, vector<1x4x4xf32>
    %102 = vector.shape_cast %101 : vector<1x4x4xf32> to vector<4x4xf32>
    %cst_46 = arith.constant dense<0.000000e+00> : vector<4x512xf32>
    %103 = tpu.matmul %102, %100, %cst_46 {dimension_numbers = #tpu.dot_dimension_numbers<[1], [0], [0], [1], [0, 0, 1, 1], [], []>} : vector<4x4xf32>, vector<4x512xf32>, vector<4x512xf32> -> vector<4x512xf32>
    %104 = arith.addf %97, %103 : vector<4x512xf32>
    %c0_47 = arith.constant 0 : index
    %c0_48 = arith.constant 0 : index
    %105 = memref.load %arg4[%c0_47, %c0_48] : memref<1x1xf32, #tpu.memory_space<smem>>
    %cst_49 = arith.constant 0.000000e+00 : f32
    %106 = vector.broadcast %cst_49 : f32 to vector<4x512xf32>
    %107 = arith.cmpf ogt, %104, %106 : vector<4x512xf32>
    %108 = vector.broadcast %105 : f32 to vector<4x512xf32>
    %109 = arith.mulf %108, %104 : vector<4x512xf32>
    %110 = arith.select %107, %104, %109 : vector<4x512xi1>, vector<4x512xf32>
    %111 = vector.extract_strided_slice %110 {offsets = [0, 0], sizes = [4, 128], strides = [1, 1]} : vector<4x512xf32> to vector<4x128xf32>
    %112 = vector.extract_strided_slice %110 {offsets = [0, 128], sizes = [4, 128], strides = [1, 1]} : vector<4x512xf32> to vector<4x128xf32>
    %113 = vector.extract_strided_slice %110 {offsets = [0, 256], sizes = [4, 128], strides = [1, 1]} : vector<4x512xf32> to vector<4x128xf32>
    %114 = vector.extract_strided_slice %110 {offsets = [0, 384], sizes = [4, 128], strides = [1, 1]} : vector<4x512xf32> to vector<4x128xf32>
    %115 = arith.mulf %114, %30 : vector<4x128xf32>
    %c1_i32_50 = arith.constant 1 : i32
    %116 = tpu.dynamic_rotate %114 by %c1_i32_50 dim 1 : vector<4x128xf32>, i32 -> vector<4x128xf32>
    %117 = arith.mulf %116, %26 : vector<4x128xf32>
    %118 = arith.addf %115, %117 : vector<4x128xf32>
    %cst_51 = arith.constant 4.000000e+00 : f32
    %119 = vector.broadcast %cst_51 : f32 to vector<4x128xf32>
    %120 = arith.mulf %119, %111 : vector<4x128xf32>
    %121 = arith.mulf %112, %30 : vector<4x128xf32>
    %c1_i32_52 = arith.constant 1 : i32
    %122 = tpu.dynamic_rotate %112 by %c1_i32_52 dim 1 : vector<4x128xf32>, i32 -> vector<4x128xf32>
    %123 = arith.mulf %122, %26 : vector<4x128xf32>
    %124 = arith.addf %121, %123 : vector<4x128xf32>
    %125 = arith.addf %124, %112 : vector<4x128xf32>
    %cst_53 = arith.constant 2.000000e+00 : f32
    %126 = vector.broadcast %cst_53 : f32 to vector<4x128xf32>
    %127 = arith.mulf %126, %125 : vector<4x128xf32>
    %128 = arith.addf %120, %127 : vector<4x128xf32>
    %129 = arith.mulf %113, %28 : vector<4x128xf32>
    %c8_i32_54 = arith.constant 8 : i32
    %130 = tpu.dynamic_rotate %113 by %c8_i32_54 dim 1 : vector<4x128xf32>, i32 -> vector<4x128xf32>
    %131 = arith.mulf %130, %23 : vector<4x128xf32>
    %132 = arith.addf %129, %131 : vector<4x128xf32>
    %133 = arith.addf %132, %113 : vector<4x128xf32>
    %cst_55 = arith.constant 2.000000e+00 : f32
    %134 = vector.broadcast %cst_55 : f32 to vector<4x128xf32>
    %135 = arith.mulf %134, %133 : vector<4x128xf32>
    %136 = arith.addf %128, %135 : vector<4x128xf32>
    %137 = arith.mulf %118, %28 : vector<4x128xf32>
    %c8_i32_56 = arith.constant 8 : i32
    %138 = tpu.dynamic_rotate %118 by %c8_i32_56 dim 1 : vector<4x128xf32>, i32 -> vector<4x128xf32>
    %139 = arith.mulf %138, %23 : vector<4x128xf32>
    %140 = arith.addf %137, %139 : vector<4x128xf32>
    %141 = arith.addf %136, %140 : vector<4x128xf32>
    %142 = arith.mulf %114, %28 : vector<4x128xf32>
    %c8_i32_57 = arith.constant 8 : i32
    %143 = tpu.dynamic_rotate %114 by %c8_i32_57 dim 1 : vector<4x128xf32>, i32 -> vector<4x128xf32>
    %144 = arith.mulf %143, %23 : vector<4x128xf32>
    %145 = arith.addf %142, %144 : vector<4x128xf32>
    %146 = arith.addf %141, %145 : vector<4x128xf32>
    %147 = arith.addf %146, %118 : vector<4x128xf32>
    %148 = arith.addf %147, %114 : vector<4x128xf32>
    %cst_58 = arith.constant 6.250000e-02 : f32
    %149 = vector.broadcast %cst_58 : f32 to vector<4x128xf32>
    %150 = arith.mulf %148, %149 : vector<4x128xf32>
    %c0_59 = arith.constant 0 : index
    %c0_60 = arith.constant 0 : index
    %151 = vector.load %arg2[%c0_59, %c0_60] : memref<8x4xf32, #tpu.memory_space<vmem>>, vector<8x4xf32>
    %cst_61 = arith.constant dense<0.000000e+00> : vector<8x128xf32>
    %152 = tpu.matmul %151, %150, %cst_61 {dimension_numbers = #tpu.dot_dimension_numbers<[1], [0], [0], [1], [0, 0, 1, 1], [], []>} : vector<8x4xf32>, vector<4x128xf32>, vector<8x128xf32> -> vector<8x128xf32>
    %c0_62 = arith.constant 0 : index
    %c0_63 = arith.constant 0 : index
    %153 = vector.load %arg5[%c0_62, %c0_63] : memref<8x128xf32, #tpu.memory_space<vmem>>, vector<8x128xf32>
    tpu.vector_store %arg5[%c0_62, %c0_63], %152 {strides = array<i32>} : memref<8x128xf32, #tpu.memory_space<vmem>>, vector<8x128xf32>,
    return
  }
}

</mosaic_0001>

<llo_original>
// kernel: downsample_forward.1
$region0: #{downsample_forward.1}
  #allocation0 [shape = 'u32[]', space=smem, size = 0x4, offset = 0x4, fixed_abs, tag = 'smem constant byte address 0x4 - core index']
  #allocation1 [shape = 'u32[144,128]{1,0:T(1,128)}', space=vmem, size = 0x12000, scoped, tag = 'internal scratch']
  #allocation2 [shape = 'f32[1,1]{1,0:T(1,128)S(6)}', space=smem, size = 0x200, scoped, tag = 'scoped memory for downsample_forward.1']
  %s0 = inlined_call_operand.vmem [shape: f32[4,4,128], index: 0, kind: input, shape index: {}]
  %s1 = inlined_call_operand.vmem [shape: f32[9,4,4], index: 1, kind: input, shape index: {}]
  %s2 = inlined_call_operand.vmem [shape: f32[8,4], index: 2, kind: input, shape index: {}]
  %s3 = inlined_call_operand.vmem [shape: f32[4,128], index: 3, kind: input, shape index: {}]
  %s4 = inlined_call_operand.<no memory space> [shape: f32[1,1], index: 4, kind: input, shape index: {}]
  %s5 = inlined_call_operand.vmem [shape: f32[8,128], index: 5, kind: output, shape index: {}]
  %s6 = sld [smem:[#allocation0]]
  $region30: #{downsample_forward.1} parent=0
    _
  %s8 = ssub.s32 1, %s6
  %s9 = scalar_select 0, %s8, %s6
  %10 = sst [smem:[#allocation2]] %s4
  // Predicated region
  $region2: #{downsample_forward.1} parent=0 // pred_check
    _
  $region3: #{downsample_forward.1} parent=0 // pred_check_branch
    %12 = sbr.rel (0) target = $region5
  $region4: #{downsample_forward.1} parent=0 // pred_region
    _
  $region5: #{downsample_forward.1} parent=0 // pred_fallthru
    _
  // Predicated region
  $region6: #{downsample_forward.1} parent=0 // pred_check
    _
  $region7: #{downsample_forward.1} parent=0 // pred_check_branch
    %14 = sbr.rel (0) target = $region9
  $region8: #{downsample_forward.1} parent=0 // pred_region
    _
  $region9: #{downsample_forward.1} parent=0 // pred_fallthru
    _
  // Predicated region
  $region10: #{downsample_forward.1} parent=0 // pred_check
    _
  $region11: #{downsample_forward.1} parent=0 // pred_check_branch
    %16 = sbr.rel (0) target = $region13
  $region12: #{downsample_forward.1} parent=0 // pred_region
    _
  $region13: #{downsample_forward.1} parent=0 // pred_fallthru
    _
  // Predicated region
  $region14: #{downsample_forward.1} parent=0 // pred_check
    _
  $region15: #{downsample_forward.1} parent=0 // pred_check_branch
    %18 = sbr.rel (0) target = $region17
  $region16: #{downsample_forward.1} parent=0 // pred_region
    _
  $region17: #{downsample_forward.1} parent=0 // pred_fallthru
    _
  // Predicated region
  $region18: #{downsample_forward.1} parent=0 // pred_check
    _
  $region19: #{downsample_forward.1} parent=0 // pred_check_branch
    %20 = sbr.rel (0) target = $region21
  $region20: #{downsample_forward.1} parent=0 // pred_region
    _
  $region21: #{downsample_forward.1} parent=0 // pred_fallthru
    _
  %v21 = vld [vmem:[%s0] sm:$0xf]
  %s22 = scalar_lea.vmem %s0, 4
  %v23 = vld [vmem:[%s22] sm:$0xf]
  %s24 = scalar_lea.vmem %s0, 8
  %v25 = vld [vmem:[%s24] sm:$0xf]
  %s26 = scalar_lea.vmem %s0, 12
  %v27 = vld [vmem:[%s26] sm:$0xf]
  %v28 = vld [vmem:[%s3] sm:$0xf]
  %v29 = vlaneseq
  %v30 = vshrl.u32 %v29, 7
  %v31 = vsub.s32 0, %v30
  %v32 = vrot.slane %v28, %v31
  %v33 = vlaneseq
  %v34 = vshrl.u32 %v33, 7
  %v35 = vsub.s32 1, %v34
  %v36 = vrot.slane %v28, %v35
  %v37 = vlaneseq
  %v38 = vshrl.u32 %v37, 7
  %v39 = vsub.s32 2, %v38
  %v40 = vrot.slane %v28, %v39
  %v41 = vlaneseq
  %v42 = vshrl.u32 %v41, 7
  %v43 = vsub.s32 3, %v42
  %v44 = vrot.slane %v28, %v43
  %v45 = vsub.f32 1.0, %v32
  %v46 = vsub.f32 1.0, %v40
  %v47 = vmul.f32 %v32, %v40
  %v48 = vmul.f32 %v32, %v44
  %v49 = vmul.f32 %v36, %v40
  %v50 = vmul.f32 %v36, %v44
  %51 = vrot.lane.b32.xlu0 %v27, 9
  %v52 = vpop.permute.xlu0 %51
  %v53 = vmul.f32 %v52, %v47
  %54 = vrot.lane.b32.xlu0 %v25, 8
  %v55 = vpop.permute.xlu0 %54
  %v56 = vmul.f32 %v55, %v32
  %57 = vrot.lane.b32.xlu0 %v23, 1
  %v58 = vpop.permute.xlu0 %57
  %v59 = vmul.f32 %v58, %v40
  %v60 = vld [vmem:[%s1] sm:$0xf]
  %61 = vrot.lane.b32.xlu0 %v27, 8
  %v62 = vpop.permute.xlu0 %61
  %v63 = vmul.f32 %v62, %v32
  %s64 = scalar_lea.vmem %s1, 4
  %v65 = vld [vmem:[%s64] sm:$0xf]
  %vm66 = vcmask 31744
  %v68 = vsel %vm66, %v65, 0
  %vm70 = vcmask 1043456
  %v72 = vsel %vm70, %v56, 0
  %v75 = vsel %vm70, %v63, 0
  %v78 = vsel %vm70, %v21, 0
  %v81 = vsel %vm70, %v23, 0
  %83 = vmatprep.subr.mxu0 %v75
  %84 = vmatpush1.msra.mxu0 %v72
  %85 = vmatprep.subr.mxu0 0.0
  %86 = vmatpush1.msra.mxu0 0.0
  %87 = vmatprep.subr.mxu0 0.0
  %88 = vmatpush1.msra.mxu0 0.0
  %89 = vmatprep.subr.mxu0 0.0
  %90 = vmatpush1.msra.mxu0 0.0
  %91 = vmatprep.subr.mxu0 0.0
  %92 = vmatpush1.msra.mxu0 0.0
  %93 = vmatprep.subr.mxu0 0.0
  %94 = vmatpush1.msra.mxu0 0.0
  %95 = vmatprep.subr.mxu0 0.0
  %96 = vmatpush1.msra.mxu0 0.0
  %97 = vmatprep.subr.mxu0 0.0
  %98 = vmatpush1.msra.mxu0 0.0
  %99 = vmatprep.subr.mxu0 0.0
  %100 = vmatpush1.msra.mxu0 0.0
  %101 = vmatprep.subr.mxu0 0.0
  %102 = vmatpush1.msra.mxu0 0.0
  %103 = vmatprep.subr.mxu0 0.0
  %104 = vmatpush1.msra.mxu0 0.0
  %105 = vmatprep.subr.mxu0 0.0
  %106 = vmatpush1.msra.mxu0 0.0
  %107 = vmatprep.subr.mxu0 0.0
  %108 = vmatpush1.msra.mxu0 0.0
  %109 = vmatprep.subr.mxu0 0.0
  %110 = vmatpush1.msra.mxu0 0.0
  %111 = vmatprep.subr.mxu0 0.0
  %112 = vmatpush1.msra.mxu0 0.0
  %113 = vmatprep.subr.mxu0 0.0
  %114 = vmatpush1.msra.mxu0 0.0
  %115 = vmatprep.subr.mxu0 0.0
  %116 = vmatpush1.msra.mxu0 0.0
  %117 = vmatprep.subr.mxu0 0.0
  %118 = vmatpush1.msra.mxu0 0.0
  %119 = vmatprep.subr.mxu0 0.0
  %120 = vmatpush1.msra.mxu0 0.0
  %121 = vmatprep.subr.mxu0 0.0
  %122 = vmatpush1.msra.mxu0 0.0
  %123 = vmatprep.subr.mxu0 0.0
  %124 = vmatpush1.msra.mxu0 0.0
  %125 = vmatprep.subr.mxu0 0.0
  %126 = vmatpush1.msra.mxu0 0.0
  %127 = vmatprep.subr.mxu0 0.0
  %128 = vmatpush1.msra.mxu0 0.0
  %129 = vmatprep.subr.mxu0 0.0
  %130 = vmatpush1.msra.mxu0 0.0
  %131 = vmatprep.subr.mxu0 0.0
  %132 = vmatpush1.msra.mxu0 0.0
  %133 = vmatprep.subr.mxu0 0.0
  %134 = vmatpush1.msra.mxu0 0.0
  %135 = vmatprep.subr.mxu0 0.0
  %136 = vmatpush1.msra.mxu0 0.0
  %137 = vmatprep.subr.mxu0 0.0
  %138 = vmatpush1.msra.mxu0 0.0
  %139 = vmatprep.subr.mxu0 0.0
  %140 = vmatpush1.msra.mxu0 0.0
  %141 = vmatprep.subr.mxu0 0.0
  %142 = vmatpush1.msra.mxu0 0.0
  %143 = vmatprep.subr.mxu0 0.0
  %144 = vmatpush1.msra.mxu0 0.0
  %145 = vmatprep.subr.mxu0 0.0
  %146 = vmatpush1.msra.mxu0 0.0
  %147 = vmatprep.mubr.f32.mxu0 0.0
  %148 = vmatmul.mubr.f32.gmra.mrb[0].mxu0 %v68
  %v149 = vpop.f32.mrb[0].mxu0
  %v150 = vadd.f32 0.0, %v149
  %v151 = vpop.f32.mrb[0].mxu0
  %v152 = vadd.f32 0.0, %v151
  %153 = vdwg.mxu0
  %154 = vmatprep.subr.mxu0 %v81
  %155 = vmatpush1.msra.mxu0 %v78
  %156 = vmatprep.subr.mxu0 0.0
  %157 = vmatpush1.msra.mxu0 0.0
  %158 = vmatprep.subr.mxu0 0.0
  %159 = vmatpush1.msra.mxu0 0.0
  %160 = vmatprep.subr.mxu0 0.0
  %161 = vmatpush1.msra.mxu0 0.0
  %162 = vmatprep.subr.mxu0 0.0
  %163 = vmatpush1.msra.mxu0 0.0
  %164 = vmatprep.subr.mxu0 0.0
  %165 = vmatpush1.msra.mxu0 0.0
  %166 = vmatprep.subr.mxu0 0.0
  %167 = vmatpush1.msra.mxu0 0.0
  %168 = vmatprep.subr.mxu0 0.0
  %169 = vmatpush1.msra.mxu0 0.0
  %170 = vmatprep.subr.mxu0 0.0
  %171 = vmatpush1.msra.mxu0 0.0
  %172 = vmatprep.subr.mxu0 0.0
  %173 = vmatpush1.msra.mxu0 0.0
  %174 = vmatprep.subr.mxu0 0.0
  %175 = vmatpush1.msra.mxu0 0.0
  %176 = vmatprep.subr.mxu0 0.0
  %177 = vmatpush1.msra.mxu0 0.0
  %178 = vmatprep.subr.mxu0 0.0
  %179 = vmatpush1.msra.mxu0 0.0
  %180 = vmatprep.subr.mxu0 0.0
  %181 = vmatpush1.msra.mxu0 0.0
  %182 = vmatprep.subr.mxu0 0.0
  %183 = vmatpush1.msra.mxu0 0.0
  %184 = vmatprep.subr.mxu0 0.0
  %185 = vmatpush1.msra.mxu0 0.0
  %186 = vmatprep.subr.mxu0 0.0
  %187 = vmatpush1.msra.mxu0 0.0
  %188 = vmatprep.subr.mxu0 0.0
  %189 = vmatpush1.msra.mxu0 0.0
  %190 = vmatprep.subr.mxu0 0.0
  %191 = vmatpush1.msra.mxu0 0.0
  %192 = vmatprep.subr.mxu0 0.0
  %193 = vmatpush1.msra.mxu0 0.0
  %194 = vmatprep.subr.mxu0 0.0
  %195 = vmatpush1.msra.mxu0 0.0
  %196 = vmatprep.subr.mxu0 0.0
  %197 = vmatpush1.msra.mxu0 0.0
  %198 = vmatprep.subr.mxu0 0.0
  %199 = vmatpush1.msra.mxu0 0.0
  %200 = vmatprep.subr.mxu0 0.0
  %201 = vmatpush1.msra.mxu0 0.0
  %202 = vmatprep.subr.mxu0 0.0
  %203 = vmatpush1.msra.mxu0 0.0
  %204 = vmatprep.subr.mxu0 0.0
  %205 = vmatpush1.msra.mxu0 0.0
  %206 = vmatprep.subr.mxu0 0.0
  %207 = vmatpush1.msra.mxu0 0.0
  %208 = vmatprep.subr.mxu0 0.0
  %209 = vmatpush1.msra.mxu0 0.0
  %210 = vmatprep.subr.mxu0 0.0
  %211 = vmatpush1.msra.mxu0 0.0
  %212 = vmatprep.subr.mxu0 0.0
  %213 = vmatpush1.msra.mxu0 0.0
  %214 = vmatprep.subr.mxu0 0.0
  %215 = vmatpush1.msra.mxu0 0.0
  %216 = vmatprep.subr.mxu0 0.0
  %217 = vmatpush1.msra.mxu0 0.0
  %218 = vmatprep.mubr.f32.mxu0 0.0
  %219 = vmatmul.mubr.f32.gmra.mrb[0].mxu0 %v68
  %v220 = vpop.f32.mrb[0].mxu0
  %v221 = vadd.f32 0.0, %v220
  %v222 = vpop.f32.mrb[0].mxu0
  %v223 = vadd.f32 0.0, %v222
  %224 = vdwg.mxu0
  %v226 = vsel %vm66, %v60, 0
  %v229 = vsel %vm70, %v53, 0
  %v232 = vsel %vm70, %v59, 0
  %234 = vmatprep.subr.mxu0 %v72
  %235 = vmatpush1.msra.mxu0 %v229
  %236 = vmatprep.subr.mxu0 0.0
  %237 = vmatpush1.msra.mxu0 0.0
  %238 = vmatprep.subr.mxu0 0.0
  %239 = vmatpush1.msra.mxu0 0.0
  %240 = vmatprep.subr.mxu0 0.0
  %241 = vmatpush1.msra.mxu0 0.0
  %242 = vmatprep.subr.mxu0 0.0
  %243 = vmatpush1.msra.mxu0 0.0
  %244 = vmatprep.subr.mxu0 0.0
  %245 = vmatpush1.msra.mxu0 0.0
  %246 = vmatprep.subr.mxu0 0.0
  %247 = vmatpush1.msra.mxu0 0.0
  %248 = vmatprep.subr.mxu0 0.0
  %249 = vmatpush1.msra.mxu0 0.0
  %250 = vmatprep.subr.mxu0 0.0
  %251 = vmatpush1.msra.mxu0 0.0
  %252 = vmatprep.subr.mxu0 0.0
  %253 = vmatpush1.msra.mxu0 0.0
  %254 = vmatprep.subr.mxu0 0.0
  %255 = vmatpush1.msra.mxu0 0.0
  %256 = vmatprep.subr.mxu0 0.0
  %257 = vmatpush1.msra.mxu0 0.0
  %258 = vmatprep.subr.mxu0 0.0
  %259 = vmatpush1.msra.mxu0 0.0
  %260 = vmatprep.subr.mxu0 0.0
  %261 = vmatpush1.msra.mxu0 0.0
  %262 = vmatprep.subr.mxu0 0.0
  %263 = vmatpush1.msra.mxu0 0.0
  %264 = vmatprep.subr.mxu0 0.0
  %265 = vmatpush1.msra.mxu0 0.0
  %266 = vmatprep.subr.mxu0 0.0
  %267 = vmatpush1.msra.mxu0 0.0
  %268 = vmatprep.subr.mxu0 0.0
  %269 = vmatpush1.msra.mxu0 0.0
  %270 = vmatprep.subr.mxu0 0.0
  %271 = vmatpush1.msra.mxu0 0.0
  %272 = vmatprep.subr.mxu0 0.0
  %273 = vmatpush1.msra.mxu0 0.0
  %274 = vmatprep.subr.mxu0 0.0
  %275 = vmatpush1.msra.mxu0 0.0
  %276 = vmatprep.subr.mxu0 0.0
  %277 = vmatpush1.msra.mxu0 0.0
  %278 = vmatprep.subr.mxu0 0.0
  %279 = vmatpush1.msra.mxu0 0.0
  %280 = vmatprep.subr.mxu0 0.0
  %281 = vmatpush1.msra.mxu0 0.0
  %282 = vmatprep.subr.mxu0 0.0
  %283 = vmatpush1.msra.mxu0 0.0
  %284 = vmatprep.subr.mxu0 0.0
  %285 = vmatpush1.msra.mxu0 0.0
  %286 = vmatprep.subr.mxu0 0.0
  %287 = vmatpush1.msra.mxu0 0.0
  %288 = vmatprep.subr.mxu0 0.0
  %289 = vmatpush1.msra.mxu0 0.0
  %290 = vmatprep.subr.mxu0 0.0
  %291 = vmatpush1.msra.mxu0 0.0
  %292 = vmatprep.subr.mxu0 0.0
  %293 = vmatpush1.msra.mxu0 0.0
  %294 = vmatprep.subr.mxu0 0.0
  %295 = vmatpush1.msra.mxu0 0.0
  %296 = vmatprep.subr.mxu0 0.0
  %297 = vmatpush1.msra.mxu0 0.0
  %298 = vmatprep.mubr.f32.mxu0 0.0
  %299 = vmatmul.mubr.f32.gmra.mrb[0].mxu0 %v226
  %v300 = vpop.f32.mrb[0].mxu0
  %v301 = vadd.f32 %v150, %v300
  %v302 = vpop.f32.mrb[0].mxu0
  %v303 = vadd.f32 %v152, %v302
  %304 = vdwg.mxu0
  %305 = vmatprep.subr.mxu0 %v78
  %306 = vmatpush1.msra.mxu0 %v232
  %307 = vmatprep.subr.mxu0 0.0
  %308 = vmatpush1.msra.mxu0 0.0
  %309 = vmatprep.subr.mxu0 0.0
  %310 = vmatpush1.msra.mxu0 0.0
  %311 = vmatprep.subr.mxu0 0.0
  %312 = vmatpush1.msra.mxu0 0.0
  %313 = vmatprep.subr.mxu0 0.0
  %314 = vmatpush1.msra.mxu0 0.0
  %315 = vmatprep.subr.mxu0 0.0
  %316 = vmatpush1.msra.mxu0 0.0
  %317 = vmatprep.subr.mxu0 0.0
  %318 = vmatpush1.msra.mxu0 0.0
  %319 = vmatprep.subr.mxu0 0.0
  %320 = vmatpush1.msra.mxu0 0.0
  %321 = vmatprep.subr.mxu0 0.0
  %322 = vmatpush1.msra.mxu0 0.0
  %323 = vmatprep.subr.mxu0 0.0
  %324 = vmatpush1.msra.mxu0 0.0
  %325 = vmatprep.subr.mxu0 0.0
  %326 = vmatpush1.msra.mxu0 0.0
  %327 = vmatprep.subr.mxu0 0.0
  %328 = vmatpush1.msra.mxu0 0.0
  %329 = vmatprep.subr.mxu0 0.0
  %330 = vmatpush1.msra.mxu0 0.0
  %331 = vmatprep.subr.mxu0 0.0
  %332 = vmatpush1.msra.mxu0 0.0
  %333 = vmatprep.subr.mxu0 0.0
  %334 = vmatpush1.msra.mxu0 0.0
  %335 = vmatprep.subr.mxu0 0.0
  %336 = vmatpush1.msra.mxu0 0.0
  %337 = vmatprep.subr.mxu0 0.0
  %338 = vmatpush1.msra.mxu0 0.0
  %339 = vmatprep.subr.mxu0 0.0
  %340 = vmatpush1.msra.mxu0 0.0
  %341 = vmatprep.subr.mxu0 0.0
  %342 = vmatpush1.msra.mxu0 0.0
  %343 = vmatprep.subr.mxu0 0.0
  %344 = vmatpush1.msra.mxu0 0.0
  %345 = vmatprep.subr.mxu0 0.0
  %346 = vmatpush1.msra.mxu0 0.0
  %347 = vmatprep.subr.mxu0 0.0
  %348 = vmatpush1.msra.mxu0 0.0
  %349 = vmatprep.subr.mxu0 0.0
  %350 = vmatpush1.msra.mxu0 0.0
  %351 = vmatprep.subr.mxu0 0.0
  %352 = vmatpush1.msra.mxu0 0.0
  %353 = vmatprep.subr.mxu0 0.0
  %354 = vmatpush1.msra.mxu0 0.0
  %355 = vmatprep.subr.mxu0 0.0
  %356 = vmatpush1.msra.mxu0 0.0
  %357 = vmatprep.subr.mxu0 0.0
  %358 = vmatpush1.msra.mxu0 0.0
  %359 = vmatprep.subr.mxu0 0.0
  %360 = vmatpush1.msra.mxu0 0.0
  %361 = vmatprep.subr.mxu0 0.0
  %362 = vmatpush1.msra.mxu0 0.0
  %363 = vmatprep.subr.mxu0 0.0
  %364 = vmatpush1.msra.mxu0 0.0
  %365 = vmatprep.subr.mxu0 0.0
  %366 = vmatpush1.msra.mxu0 0.0
  %367 = vmatprep.subr.mxu0 0.0
  %368 = vmatpush1.msra.mxu0 0.0
  %369 = vmatprep.mubr.f32.mxu0 0.0
  %370 = vmatmul.mubr.f32.gmra.mrb[0].mxu0 %v226
  %v371 = vpop.f32.mrb[0].mxu0
  %v372 = vadd.f32 %v221, %v371
  %v373 = vpop.f32.mrb[0].mxu0
  %v374 = vadd.f32 %v223, %v373
  %375 = vdwg.mxu0
  %376 = vrot.lane.b32.xlu0 %v25, 7
  %v377 = vpop.permute.xlu0 %376
  %v378 = vmul.f32 %v377, %v48
  %379 = vrot.lane.b32.xlu0 %v21, 127
  %v380 = vpop.permute.xlu0 %379
  %v381 = vmul.f32 %v380, %v44
  %s382 = scalar_lea.vmem %s1, 8
  %v383 = vld [vmem:[%s382] sm:$0xf]
  %v385 = vsel %vm66, %v383, 0
  %v388 = vsel %vm70, %v378, 0
  %v391 = vsel %vm70, %v381, 0
  %393 = vmatprep.subr.mxu0 %v388
  %394 = vmatpush1.msra.mxu0 %v75
  %395 = vmatprep.subr.mxu0 0.0
  %396 = vmatpush1.msra.mxu0 0.0
  %397 = vmatprep.subr.mxu0 0.0
  %398 = vmatpush1.msra.mxu0 0.0
  %399 = vmatprep.subr.mxu0 0.0
  %400 = vmatpush1.msra.mxu0 0.0
  %401 = vmatprep.subr.mxu0 0.0
  %402 = vmatpush1.msra.mxu0 0.0
  %403 = vmatprep.subr.mxu0 0.0
  %404 = vmatpush1.msra.mxu0 0.0
  %405 = vmatprep.subr.mxu0 0.0
  %406 = vmatpush1.msra.mxu0 0.0
  %407 = vmatprep.subr.mxu0 0.0
  %408 = vmatpush1.msra.mxu0 0.0
  %409 = vmatprep.subr.mxu0 0.0
  %410 = vmatpush1.msra.mxu0 0.0
  %411 = vmatprep.subr.mxu0 0.0
  %412 = vmatpush1.msra.mxu0 0.0
  %413 = vmatprep.subr.mxu0 0.0
  %414 = vmatpush1.msra.mxu0 0.0
  %415 = vmatprep.subr.mxu0 0.0
  %416 = vmatpush1.msra.mxu0 0.0
  %417 = vmatprep.subr.mxu0 0.0
  %418 = vmatpush1.msra.mxu0 0.0
  %419 = vmatprep.subr.mxu0 0.0
  %420 = vmatpush1.msra.mxu0 0.0
  %421 = vmatprep.subr.mxu0 0.0
  %422 = vmatpush1.msra.mxu0 0.0
  %423 = vmatprep.subr.mxu0 0.0
  %424 = vmatpush1.msra.mxu0 0.0
  %425 = vmatprep.subr.mxu0 0.0
  %426 = vmatpush1.msra.mxu0 0.0
  %427 = vmatprep.subr.mxu0 0.0
  %428 = vmatpush1.msra.mxu0 0.0
  %429 = vmatprep.subr.mxu0 0.0
  %430 = vmatpush1.msra.mxu0 0.0
  %431 = vmatprep.subr.mxu0 0.0
  %432 = vmatpush1.msra.mxu0 0.0
  %433 = vmatprep.subr.mxu0 0.0
  %434 = vmatpush1.msra.mxu0 0.0
  %435 = vmatprep.subr.mxu0 0.0
  %436 = vmatpush1.msra.mxu0 0.0
  %437 = vmatprep.subr.mxu0 0.0
  %438 = vmatpush1.msra.mxu0 0.0
  %439 = vmatprep.subr.mxu0 0.0
  %440 = vmatpush1.msra.mxu0 0.0
  %441 = vmatprep.subr.mxu0 0.0
  %442 = vmatpush1.msra.mxu0 0.0
  %443 = vmatprep.subr.mxu0 0.0
  %444 = vmatpush1.msra.mxu0 0.0
  %445 = vmatprep.subr.mxu0 0.0
  %446 = vmatpush1.msra.mxu0 0.0
  %447 = vmatprep.subr.mxu0 0.0
  %448 = vmatpush1.msra.mxu0 0.0
  %449 = vmatprep.subr.mxu0 0.0
  %450 = vmatpush1.msra.mxu0 0.0
  %451 = vmatprep.subr.mxu0 0.0
  %452 = vmatpush1.msra.mxu0 0.0
  %453 = vmatprep.subr.mxu0 0.0
  %454 = vmatpush1.msra.mxu0 0.0
  %455 = vmatprep.subr.mxu0 0.0
  %456 = vmatpush1.msra.mxu0 0.0
  %457 = vmatprep.mubr.f32.mxu0 0.0
  %458 = vmatmul.mubr.f32.gmra.mrb[0].mxu0 %v385
  %v459 = vpop.f32.mrb[0].mxu0
  %v460 = vadd.f32 0.0, %v459
  %v461 = vpop.f32.mrb[0].mxu0
  %v462 = vadd.f32 0.0, %v461
  %463 = vdwg.mxu0
  %464 = vmatprep.subr.mxu0 %v391
  %465 = vmatpush1.msra.mxu0 %v81
  %466 = vmatprep.subr.mxu0 0.0
  %467 = vmatpush1.msra.mxu0 0.0
  %468 = vmatprep.subr.mxu0 0.0
  %469 = vmatpush1.msra.mxu0 0.0
  %470 = vmatprep.subr.mxu0 0.0
  %471 = vmatpush1.msra.mxu0 0.0
  %472 = vmatprep.subr.mxu0 0.0
  %473 = vmatpush1.msra.mxu0 0.0
  %474 = vmatprep.subr.mxu0 0.0
  %475 = vmatpush1.msra.mxu0 0.0
  %476 = vmatprep.subr.mxu0 0.0
  %477 = vmatpush1.msra.mxu0 0.0
  %478 = vmatprep.subr.mxu0 0.0
  %479 = vmatpush1.msra.mxu0 0.0
  %480 = vmatprep.subr.mxu0 0.0
  %481 = vmatpush1.msra.mxu0 0.0
  %482 = vmatprep.subr.mxu0 0.0
  %483 = vmatpush1.msra.mxu0 0.0
  %484 = vmatprep.subr.mxu0 0.0
  %485 = vmatpush1.msra.mxu0 0.0
  %486 = vmatprep.subr.mxu0 0.0
  %487 = vmatpush1.msra.mxu0 0.0
  %488 = vmatprep.subr.mxu0 0.0
  %489 = vmatpush1.msra.mxu0 0.0
  %490 = vmatprep.subr.mxu0 0.0
  %491 = vmatpush1.msra.mxu0 0.0
  %492 = vmatprep.subr.mxu0 0.0
  %493 = vmatpush1.msra.mxu0 0.0
  %494 = vmatprep.subr.mxu0 0.0
  %495 = vmatpush1.msra.mxu0 0.0
  %496 = vmatprep.subr.mxu0 0.0
  %497 = vmatpush1.msra.mxu0 0.0
  %498 = vmatprep.subr.mxu0 0.0
  %499 = vmatpush1.msra.mxu0 0.0
  %500 = vmatprep.subr.mxu0 0.0
  %501 = vmatpush1.msra.mxu0 0.0
  %502 = vmatprep.subr.mxu0 0.0
  %503 = vmatpush1.msra.mxu0 0.0
  %504 = vmatprep.subr.mxu0 0.0
  %505 = vmatpush1.msra.mxu0 0.0
  %506 = vmatprep.subr.mxu0 0.0
  %507 = vmatpush1.msra.mxu0 0.0
  %508 = vmatprep.subr.mxu0 0.0
  %509 = vmatpush1.msra.mxu0 0.0
  %510 = vmatprep.subr.mxu0 0.0
  %511 = vmatpush1.msra.mxu0 0.0
  %512 = vmatprep.subr.mxu0 0.0
  %513 = vmatpush1.msra.mxu0 0.0
  %514 = vmatprep.subr.mxu0 0.0
  %515 = vmatpush1.msra.mxu0 0.0
  %516 = vmatprep.subr.mxu0 0.0
  %517 = vmatpush1.msra.mxu0 0.0
  %518 = vmatprep.subr.mxu0 0.0
  %519 = vmatpush1.msra.mxu0 0.0
  %520 = vmatprep.subr.mxu0 0.0
  %521 = vmatpush1.msra.mxu0 0.0
  %522 = vmatprep.subr.mxu0 0.0
  %523 = vmatpush1.msra.mxu0 0.0
  %524 = vmatprep.subr.mxu0 0.0
  %525 = vmatpush1.msra.mxu0 0.0
  %526 = vmatprep.subr.mxu0 0.0
  %527 = vmatpush1.msra.mxu0 0.0
  %528 = vmatprep.mubr.f32.mxu0 0.0
  %529 = vmatmul.mubr.f32.gmra.mrb[0].mxu0 %v385
  %v530 = vpop.f32.mrb[0].mxu0
  %v531 = vadd.f32 0.0, %v530
  %v532 = vpop.f32.mrb[0].mxu0
  %v533 = vadd.f32 0.0, %v532
  %534 = vdwg.mxu0
  %v535 = vadd.f32 %v301, %v460
  %v536 = vadd.f32 %v303, %v462
  %v537 = vadd.f32 %v372, %v531
  %v538 = vadd.f32 %v374, %v533
  %539 = vrot.lane.b32.xlu0 %v27, 1
  %v540 = vpop.permute.xlu0 %539
  %v541 = vmul.f32 %v540, %v40
  %s542 = scalar_lea.vmem %s1, 12
  %v543 = vld [vmem:[%s542] sm:$0xf]
  %v545 = vsel %vm66, %v543, 0
  %v548 = vsel %vm70, %v541, 0
  %v551 = vsel %vm70, %v25, 0
  %553 = vmatprep.subr.mxu0 %v78
  %554 = vmatpush1.msra.mxu0 %v232
  %555 = vmatprep.subr.mxu0 0.0
  %556 = vmatpush1.msra.mxu0 0.0
  %557 = vmatprep.subr.mxu0 0.0
  %558 = vmatpush1.msra.mxu0 0.0
  %559 = vmatprep.subr.mxu0 0.0
  %560 = vmatpush1.msra.mxu0 0.0
  %561 = vmatprep.subr.mxu0 0.0
  %562 = vmatpush1.msra.mxu0 0.0
  %563 = vmatprep.subr.mxu0 0.0
  %564 = vmatpush1.msra.mxu0 0.0
  %565 = vmatprep.subr.mxu0 0.0
  %566 = vmatpush1.msra.mxu0 0.0
  %567 = vmatprep.subr.mxu0 0.0
  %568 = vmatpush1.msra.mxu0 0.0
  %569 = vmatprep.subr.mxu0 0.0
  %570 = vmatpush1.msra.mxu0 0.0
  %571 = vmatprep.subr.mxu0 0.0
  %572 = vmatpush1.msra.mxu0 0.0
  %573 = vmatprep.subr.mxu0 0.0
  %574 = vmatpush1.msra.mxu0 0.0
  %575 = vmatprep.subr.mxu0 0.0
  %576 = vmatpush1.msra.mxu0 0.0
  %577 = vmatprep.subr.mxu0 0.0
  %578 = vmatpush1.msra.mxu0 0.0
  %579 = vmatprep.subr.mxu0 0.0
  %580 = vmatpush1.msra.mxu0 0.0
  %581 = vmatprep.subr.mxu0 0.0
  %582 = vmatpush1.msra.mxu0 0.0
  %583 = vmatprep.subr.mxu0 0.0
  %584 = vmatpush1.msra.mxu0 0.0
  %585 = vmatprep.subr.mxu0 0.0
  %586 = vmatpush1.msra.mxu0 0.0
  %587 = vmatprep.subr.mxu0 0.0
  %588 = vmatpush1.msra.mxu0 0.0
  %589 = vmatprep.subr.mxu0 0.0
  %590 = vmatpush1.msra.mxu0 0.0
  %591 = vmatprep.subr.mxu0 0.0
  %592 = vmatpush1.msra.mxu0 0.0
  %593 = vmatprep.subr.mxu0 0.0
  %594 = vmatpush1.msra.mxu0 0.0
  %595 = vmatprep.subr.mxu0 0.0
  %596 = vmatpush1.msra.mxu0 0.0
  %597 = vmatprep.subr.mxu0 0.0
  %598 = vmatpush1.msra.mxu0 0.0
  %599 = vmatprep.subr.mxu0 0.0
  %600 = vmatpush1.msra.mxu0 0.0
  %601 = vmatprep.subr.mxu0 0.0
  %602 = vmatpush1.msra.mxu0 0.0
  %603 = vmatprep.subr.mxu0 0.0
  %604 = vmatpush1.msra.mxu0 0.0
  %605 = vmatprep.subr.mxu0 0.0
  %606 = vmatpush1.msra.mxu0 0.0
  %607 = vmatprep.subr.mxu0 0.0
  %608 = vmatpush1.msra.mxu0 0.0
  %609 = vmatprep.subr.mxu0 0.0
  %610 = vmatpush1.msra.mxu0 0.0
  %611 = vmatprep.subr.mxu0 0.0
  %612 = vmatpush1.msra.mxu0 0.0
  %613 = vmatprep.subr.mxu0 0.0
  %614 = vmatpush1.msra.mxu0 0.0
  %615 = vmatprep.subr.mxu0 0.0
  %616 = vmatpush1.msra.mxu0 0.0
  %617 = vmatprep.mubr.f32.mxu0 0.0
  %618 = vmatmul.mubr.f32.gmra.mrb[0].mxu0 %v545
  %v619 = vpop.f32.mrb[0].mxu0
  %v620 = vadd.f32 0.0, %v619
  %v621 = vpop.f32.mrb[0].mxu0
  %v622 = vadd.f32 0.0, %v621
  %623 = vdwg.mxu0
  %624 = vmatprep.subr.mxu0 %v551
  %625 = vmatpush1.msra.mxu0 %v548
  %626 = vmatprep.subr.mxu0 0.0
  %627 = vmatpush1.msra.mxu0 0.0
  %628 = vmatprep.subr.mxu0 0.0
  %629 = vmatpush1.msra.mxu0 0.0
  %630 = vmatprep.subr.mxu0 0.0
  %631 = vmatpush1.msra.mxu0 0.0
  %632 = vmatprep.subr.mxu0 0.0
  %633 = vmatpush1.msra.mxu0 0.0
  %634 = vmatprep.subr.mxu0 0.0
  %635 = vmatpush1.msra.mxu0 0.0
  %636 = vmatprep.subr.mxu0 0.0
  %637 = vmatpush1.msra.mxu0 0.0
  %638 = vmatprep.subr.mxu0 0.0
  %639 = vmatpush1.msra.mxu0 0.0
  %640 = vmatprep.subr.mxu0 0.0
  %641 = vmatpush1.msra.mxu0 0.0
  %642 = vmatprep.subr.mxu0 0.0
  %643 = vmatpush1.msra.mxu0 0.0
  %644 = vmatprep.subr.mxu0 0.0
  %645 = vmatpush1.msra.mxu0 0.0
  %646 = vmatprep.subr.mxu0 0.0
  %647 = vmatpush1.msra.mxu0 0.0
  %648 = vmatprep.subr.mxu0 0.0
  %649 = vmatpush1.msra.mxu0 0.0
  %650 = vmatprep.subr.mxu0 0.0
  %651 = vmatpush1.msra.mxu0 0.0
  %652 = vmatprep.subr.mxu0 0.0
  %653 = vmatpush1.msra.mxu0 0.0
  %654 = vmatprep.subr.mxu0 0.0
  %655 = vmatpush1.msra.mxu0 0.0
  %656 = vmatprep.subr.mxu0 0.0
  %657 = vmatpush1.msra.mxu0 0.0
  %658 = vmatprep.subr.mxu0 0.0
  %659 = vmatpush1.msra.mxu0 0.0
  %660 = vmatprep.subr.mxu0 0.0
  %661 = vmatpush1.msra.mxu0 0.0
  %662 = vmatprep.subr.mxu0 0.0
  %663 = vmatpush1.msra.mxu0 0.0
  %664 = vmatprep.subr.mxu0 0.0
  %665 = vmatpush1.msra.mxu0 0.0
  %666 = vmatprep.subr.mxu0 0.0
  %667 = vmatpush1.msra.mxu0 0.0
  %668 = vmatprep.subr.mxu0 0.0
  %669 = vmatpush1.msra.mxu0 0.0
  %670 = vmatprep.subr.mxu0 0.0
  %671 = vmatpush1.msra.mxu0 0.0
  %672 = vmatprep.subr.mxu0 0.0
  %673 = vmatpush1.msra.mxu0 0.0
  %674 = vmatprep.subr.mxu0 0.0
  %675 = vmatpush1.msra.mxu0 0.0
  %676 = vmatprep.subr.mxu0 0.0
  %677 = vmatpush1.msra.mxu0 0.0
  %678 = vmatprep.subr.mxu0 0.0
  %679 = vmatpush1.msra.mxu0 0.0
  %680 = vmatprep.subr.mxu0 0.0
  %681 = vmatpush1.msra.mxu0 0.0
  %682 = vmatprep.subr.mxu0 0.0
  %683 = vmatpush1.msra.mxu0 0.0
  %684 = vmatprep.subr.mxu0 0.0
  %685 = vmatpush1.msra.mxu0 0.0
  %686 = vmatprep.subr.mxu0 0.0
  %687 = vmatpush1.msra.mxu0 0.0
  %688 = vmatprep.mubr.f32.mxu0 0.0
  %689 = vmatmul.mubr.f32.gmra.mrb[0].mxu0 %v545
  %v690 = vpop.f32.mrb[0].mxu0
  %v691 = vadd.f32 0.0, %v690
  %v692 = vpop.f32.mrb[0].mxu0
  %v693 = vadd.f32 0.0, %v692
  %694 = vdwg.mxu0
  %v695 = vadd.f32 %v535, %v620
  %v696 = vadd.f32 %v536, %v622
  %v697 = vadd.f32 %v537, %v691
  %v698 = vadd.f32 %v538, %v693
  %s699 = scalar_lea.vmem %s1, 16
  %v700 = vld [vmem:[%s699] sm:$0xf]
  %v702 = vsel %vm66, %v700, 0
  %v705 = vsel %vm70, %v27, 0
  %707 = vmatprep.subr.mxu0 %v81
  %708 = vmatpush1.msra.mxu0 %v78
  %709 = vmatprep.subr.mxu0 0.0
  %710 = vmatpush1.msra.mxu0 0.0
  %711 = vmatprep.subr.mxu0 0.0
  %712 = vmatpush1.msra.mxu0 0.0
  %713 = vmatprep.subr.mxu0 0.0
  %714 = vmatpush1.msra.mxu0 0.0
  %715 = vmatprep.subr.mxu0 0.0
  %716 = vmatpush1.msra.mxu0 0.0
  %717 = vmatprep.subr.mxu0 0.0
  %718 = vmatpush1.msra.mxu0 0.0
  %719 = vmatprep.subr.mxu0 0.0
  %720 = vmatpush1.msra.mxu0 0.0
  %721 = vmatprep.subr.mxu0 0.0
  %722 = vmatpush1.msra.mxu0 0.0
  %723 = vmatprep.subr.mxu0 0.0
  %724 = vmatpush1.msra.mxu0 0.0
  %725 = vmatprep.subr.mxu0 0.0
  %726 = vmatpush1.msra.mxu0 0.0
  %727 = vmatprep.subr.mxu0 0.0
  %728 = vmatpush1.msra.mxu0 0.0
  %729 = vmatprep.subr.mxu0 0.0
  %730 = vmatpush1.msra.mxu0 0.0
  %731 = vmatprep.subr.mxu0 0.0
  %732 = vmatpush1.msra.mxu0 0.0
  %733 = vmatprep.subr.mxu0 0.0
  %734 = vmatpush1.msra.mxu0 0.0
  %735 = vmatprep.subr.mxu0 0.0
  %736 = vmatpush1.msra.mxu0 0.0
  %737 = vmatprep.subr.mxu0 0.0
  %738 = vmatpush1.msra.mxu0 0.0
  %739 = vmatprep.subr.mxu0 0.0
  %740 = vmatpush1.msra.mxu0 0.0
  %741 = vmatprep.subr.mxu0 0.0
  %742 = vmatpush1.msra.mxu0 0.0
  %743 = vmatprep.subr.mxu0 0.0
  %744 = vmatpush1.msra.mxu0 0.0
  %745 = vmatprep.subr.mxu0 0.0
  %746 = vmatpush1.msra.mxu0 0.0
  %747 = vmatprep.subr.mxu0 0.0
  %748 = vmatpush1.msra.mxu0 0.0
  %749 = vmatprep.subr.mxu0 0.0
  %750 = vmatpush1.msra.mxu0 0.0
  %751 = vmatprep.subr.mxu0 0.0
  %752 = vmatpush1.msra.mxu0 0.0
  %753 = vmatprep.subr.mxu0 0.0
  %754 = vmatpush1.msra.mxu0 0.0
  %755 = vmatprep.subr.mxu0 0.0
  %756 = vmatpush1.msra.mxu0 0.0
  %757 = vmatprep.subr.mxu0 0.0
  %758 = vmatpush1.msra.mxu0 0.0
  %759 = vmatprep.subr.mxu0 0.0
  %760 = vmatpush1.msra.mxu0 0.0
  %761 = vmatprep.subr.mxu0 0.0
  %762 = vmatpush1.msra.mxu0 0.0
  %763 = vmatprep.subr.mxu0 0.0
  %764 = vmatpush1.msra.mxu0 0.0
  %765 = vmatprep.subr.mxu0 0.0
  %766 = vmatpush1.msra.mxu0 0.0
  %767 = vmatprep.subr.mxu0 0.0
  %768 = vmatpush1.msra.mxu0 0.0
  %769 = vmatprep.subr.mxu0 0.0
  %770 = vmatpush1.msra.mxu0 0.0
  %771 = vmatprep.mubr.f32.mxu0 0.0
  %772 = vmatmul.mubr.f32.gmra.mrb[0].mxu0 %v702
  %v773 = vpop.f32.mrb[0].mxu0
  %v774 = vadd.f32 0.0, %v773
  %v775 = vpop.f32.mrb[0].mxu0
  %v776 = vadd.f32 0.0, %v775
  %777 = vdwg.mxu0
  %778 = vmatprep.subr.mxu0 %v705
  %779 = vmatpush1.msra.mxu0 %v551
  %780 = vmatprep.subr.mxu0 0.0
  %781 = vmatpush1.msra.mxu0 0.0
  %782 = vmatprep.subr.mxu0 0.0
  %783 = vmatpush1.msra.mxu0 0.0
  %784 = vmatprep.subr.mxu0 0.0
  %785 = vmatpush1.msra.mxu0 0.0
  %786 = vmatprep.subr.mxu0 0.0
  %787 = vmatpush1.msra.mxu0 0.0
  %788 = vmatprep.subr.mxu0 0.0
  %789 = vmatpush1.msra.mxu0 0.0
  %790 = vmatprep.subr.mxu0 0.0
  %791 = vmatpush1.msra.mxu0 0.0
  %792 = vmatprep.subr.mxu0 0.0
  %793 = vmatpush1.msra.mxu0 0.0
  %794 = vmatprep.subr.mxu0 0.0
  %795 = vmatpush1.msra.mxu0 0.0
  %796 = vmatprep.subr.mxu0 0.0
  %797 = vmatpush1.msra.mxu0 0.0
  %798 = vmatprep.subr.mxu0 0.0
  %799 = vmatpush1.msra.mxu0 0.0
  %800 = vmatprep.subr.mxu0 0.0
  %801 = vmatpush1.msra.mxu0 0.0
  %802 = vmatprep.subr.mxu0 0.0
  %803 = vmatpush1.msra.mxu0 0.0
  %804 = vmatprep.subr.mxu0 0.0
  %805 = vmatpush1.msra.mxu0 0.0
  %806 = vmatprep.subr.mxu0 0.0
  %807 = vmatpush1.msra.mxu0 0.0
  %808 = vmatprep.subr.mxu0 0.0
  %809 = vmatpush1.msra.mxu0 0.0
  %810 = vmatprep.subr.mxu0 0.0
  %811 = vmatpush1.msra.mxu0 0.0
  %812 = vmatprep.subr.mxu0 0.0
  %813 = vmatpush1.msra.mxu0 0.0
  %814 = vmatprep.subr.mxu0 0.0
  %815 = vmatpush1.msra.mxu0 0.0
  %816 = vmatprep.subr.mxu0 0.0
  %817 = vmatpush1.msra.mxu0 0.0
  %818 = vmatprep.subr.mxu0 0.0
  %819 = vmatpush1.msra.mxu0 0.0
  %820 = vmatprep.subr.mxu0 0.0
  %821 = vmatpush1.msra.mxu0 0.0
  %822 = vmatprep.subr.mxu0 0.0
  %823 = vmatpush1.msra.mxu0 0.0
  %824 = vmatprep.subr.mxu0 0.0
  %825 = vmatpush1.msra.mxu0 0.0
  %826 = vmatprep.subr.mxu0 0.0
  %827 = vmatpush1.msra.mxu0 0.0
  %828 = vmatprep.subr.mxu0 0.0
  %829 = vmatpush1.msra.mxu0 0.0
  %830 = vmatprep.subr.mxu0 0.0
  %831 = vmatpush1.msra.mxu0 0.0
  %832 = vmatprep.subr.mxu0 0.0
  %833 = vmatpush1.msra.mxu0 0.0
  %834 = vmatprep.subr.mxu0 0.0
  %835 = vmatpush1.msra.mxu0 0.0
  %836 = vmatprep.subr.mxu0 0.0
  %837 = vmatpush1.msra.mxu0 0.0
  %838 = vmatprep.subr.mxu0 0.0
  %839 = vmatpush1.msra.mxu0 0.0
  %840 = vmatprep.subr.mxu0 0.0
  %841 = vmatpush1.msra.mxu0 0.0
  %842 = vmatprep.mubr.f32.mxu0 0.0
  %843 = vmatmul.mubr.f32.gmra.mrb[0].mxu0 %v702
  %v844 = vpop.f32.mrb[0].mxu0
  %v845 = vadd.f32 0.0, %v844
  %v846 = vpop.f32.mrb[0].mxu0
  %v847 = vadd.f32 0.0, %v846
  %848 = vdwg.mxu0
  %v849 = vadd.f32 %v695, %v774
  %v850 = vadd.f32 %v696, %v776
  %v851 = vadd.f32 %v697, %v845
  %v852 = vadd.f32 %v698, %v847
  %853 = vrot.lane.b32.xlu0 %v25, 127
  %v854 = vpop.permute.xlu0 %853
  %v855 = vmul.f32 %v854, %v44
  %s856 = scalar_lea.vmem %s1, 20
  %v857 = vld [vmem:[%s856] sm:$0xf]
  %v859 = vsel %vm66, %v857, 0
  %v862 = vsel %vm70, %v855, 0
  %864 = vmatprep.subr.mxu0 %v391
  %865 = vmatpush1.msra.mxu0 %v81
  %866 = vmatprep.subr.mxu0 0.0
  %867 = vmatpush1.msra.mxu0 0.0
  %868 = vmatprep.subr.mxu0 0.0
  %869 = vmatpush1.msra.mxu0 0.0
  %870 = vmatprep.subr.mxu0 0.0
  %871 = vmatpush1.msra.mxu0 0.0
  %872 = vmatprep.subr.mxu0 0.0
  %873 = vmatpush1.msra.mxu0 0.0
  %874 = vmatprep.subr.mxu0 0.0
  %875 = vmatpush1.msra.mxu0 0.0
  %876 = vmatprep.subr.mxu0 0.0
  %877 = vmatpush1.msra.mxu0 0.0
  %878 = vmatprep.subr.mxu0 0.0
  %879 = vmatpush1.msra.mxu0 0.0
  %880 = vmatprep.subr.mxu0 0.0
  %881 = vmatpush1.msra.mxu0 0.0
  %882 = vmatprep.subr.mxu0 0.0
  %883 = vmatpush1.msra.mxu0 0.0
  %884 = vmatprep.subr.mxu0 0.0
  %885 = vmatpush1.msra.mxu0 0.0
  %886 = vmatprep.subr.mxu0 0.0
  %887 = vmatpush1.msra.mxu0 0.0
  %888 = vmatprep.subr.mxu0 0.0
  %889 = vmatpush1.msra.mxu0 0.0
  %890 = vmatprep.subr.mxu0 0.0
  %891 = vmatpush1.msra.mxu0 0.0
  %892 = vmatprep.subr.mxu0 0.0
  %893 = vmatpush1.msra.mxu0 0.0
  %894 = vmatprep.subr.mxu0 0.0
  %895 = vmatpush1.msra.mxu0 0.0
  %896 = vmatprep.subr.mxu0 0.0
  %897 = vmatpush1.msra.mxu0 0.0
  %898 = vmatprep.subr.mxu0 0.0
  %899 = vmatpush1.msra.mxu0 0.0
  %900 = vmatprep.subr.mxu0 0.0
  %901 = vmatpush1.msra.mxu0 0.0
  %902 = vmatprep.subr.mxu0 0.0
  %903 = vmatpush1.msra.mxu0 0.0
  %904 = vmatprep.subr.mxu0 0.0
  %905 = vmatpush1.msra.mxu0 0.0
  %906 = vmatprep.subr.mxu0 0.0
  %907 = vmatpush1.msra.mxu0 0.0
  %908 = vmatprep.subr.mxu0 0.0
  %909 = vmatpush1.msra.mxu0 0.0
  %910 = vmatprep.subr.mxu0 0.0
  %911 = vmatpush1.msra.mxu0 0.0
  %912 = vmatprep.subr.mxu0 0.0
  %913 = vmatpush1.msra.mxu0 0.0
  %914 = vmatprep.subr.mxu0 0.0
  %915 = vmatpush1.msra.mxu0 0.0
  %916 = vmatprep.subr.mxu0 0.0
  %917 = vmatpush1.msra.mxu0 0.0
  %918 = vmatprep.subr.mxu0 0.0
  %919 = vmatpush1.msra.mxu0 0.0
  %920 = vmatprep.subr.mxu0 0.0
  %921 = vmatpush1.msra.mxu0 0.0
  %922 = vmatprep.subr.mxu0 0.0
  %923 = vmatpush1.msra.mxu0 0.0
  %924 = vmatprep.subr.mxu0 0.0
  %925 = vmatpush1.msra.mxu0 0.0
  %926 = vmatprep.subr.mxu0 0.0
  %927 = vmatpush1.msra.mxu0 0.0
  %928 = vmatprep.mubr.f32.mxu0 0.0
  %929 = vmatmul.mubr.f32.gmra.mrb[0].mxu0 %v859
  %v930 = vpop.f32.mrb[0].mxu0
  %v931 = vadd.f32 0.0, %v930
  %v932 = vpop.f32.mrb[0].mxu0
  %v933 = vadd.f32 0.0, %v932
  %934 = vdwg.mxu0
  %935 = vmatprep.subr.mxu0 %v862
  %936 = vmatpush1.msra.mxu0 %v705
  %937 = vmatprep.subr.mxu0 0.0
  %938 = vmatpush1.msra.mxu0 0.0
  %939 = vmatprep.subr.mxu0 0.0
  %940 = vmatpush1.msra.mxu0 0.0
  %941 = vmatprep.subr.mxu0 0.0
  %942 = vmatpush1.msra.mxu0 0.0
  %943 = vmatprep.subr.mxu0 0.0
  %944 = vmatpush1.msra.mxu0 0.0
  %945 = vmatprep.subr.mxu0 0.0
  %946 = vmatpush1.msra.mxu0 0.0
  %947 = vmatprep.subr.mxu0 0.0
  %948 = vmatpush1.msra.mxu0 0.0
  %949 = vmatprep.subr.mxu0 0.0
  %950 = vmatpush1.msra.mxu0 0.0
  %951 = vmatprep.subr.mxu0 0.0
  %952 = vmatpush1.msra.mxu0 0.0
  %953 = vmatprep.subr.mxu0 0.0
  %954 = vmatpush1.msra.mxu0 0.0
  %955 = vmatprep.subr.mxu0 0.0
  %956 = vmatpush1.msra.mxu0 0.0
  %957 = vmatprep.subr.mxu0 0.0
  %958 = vmatpush1.msra.mxu0 0.0
  %959 = vmatprep.subr.mxu0 0.0
  %960 = vmatpush1.msra.mxu0 0.0
  %961 = vmatprep.subr.mxu0 0.0
  %962 = vmatpush1.msra.mxu0 0.0
  %963 = vmatprep.subr.mxu0 0.0
  %964 = vmatpush1.msra.mxu0 0.0
  %965 = vmatprep.subr.mxu0 0.0
  %966 = vmatpush1.msra.mxu0 0.0
  %967 = vmatprep.subr.mxu0 0.0
  %968 = vmatpush1.msra.mxu0 0.0
  %969 = vmatprep.subr.mxu0 0.0
  %970 = vmatpush1.msra.mxu0 0.0
  %971 = vmatprep.subr.mxu0 0.0
  %972 = vmatpush1.msra.mxu0 0.0
  %973 = vmatprep.subr.mxu0 0.0
  %974 = vmatpush1.msra.mxu0 0.0
  %975 = vmatprep.subr.mxu0 0.0
  %976 = vmatpush1.msra.mxu0 0.0
  %977 = vmatprep.subr.mxu0 0.0
  %978 = vmatpush1.msra.mxu0 0.0
  %979 = vmatprep.subr.mxu0 0.0
  %980 = vmatpush1.msra.mxu0 0.0
  %981 = vmatprep.subr.mxu0 0.0
  %982 = vmatpush1.msra.mxu0 0.0
  %983 = vmatprep.subr.mxu0 0.0
  %984 = vmatpush1.msra.mxu0 0.0
  %985 = vmatprep.subr.mxu0 0.0
  %986 = vmatpush1.msra.mxu0 0.0
  %987 = vmatprep.subr.mxu0 0.0
  %988 = vmatpush1.msra.mxu0 0.0
  %989 = vmatprep.subr.mxu0 0.0
  %990 = vmatpush1.msra.mxu0 0.0
  %991 = vmatprep.subr.mxu0 0.0
  %992 = vmatpush1.msra.mxu0 0.0
  %993 = vmatprep.subr.mxu0 0.0
  %994 = vmatpush1.msra.mxu0 0.0
  %995 = vmatprep.subr.mxu0 0.0
  %996 = vmatpush1.msra.mxu0 0.0
  %997 = vmatprep.subr.mxu0 0.0
  %998 = vmatpush1.msra.mxu0 0.0
  %999 = vmatprep.mubr.f32.mxu0 0.0
  %1000 = vmatmul.mubr.f32.gmra.mrb[0].mxu0 %v859
  %v1001 = vpop.f32.mrb[0].mxu0
  %v1002 = vadd.f32 0.0, %v1001
  %v1003 = vpop.f32.mrb[0].mxu0
  %v1004 = vadd.f32 0.0, %v1003
  %1005 = vdwg.mxu0
  %v1006 = vadd.f32 %v849, %v931
  %v1007 = vadd.f32 %v850, %v933
  %v1008 = vadd.f32 %v851, %v1002
  %v1009 = vadd.f32 %v852, %v1004
  %1010 = vrot.lane.b32.xlu0 %v23, 121
  %v1011 = vpop.permute.xlu0 %1010
  %v1012 = vmul.f32 %v1011, %v49
  %1013 = vrot.lane.b32.xlu0 %v21, 120
  %v1014 = vpop.permute.xlu0 %1013
  %v1015 = vmul.f32 %v1014, %v36
  %s1016 = scalar_lea.vmem %s1, 24
  %v1017 = vld [vmem:[%s1016] sm:$0xf]
  %v1019 = vsel %vm66, %v1017, 0
  %v1022 = vsel %vm70, %v1012, 0
  %v1025 = vsel %vm70, %v1015, 0
  %1027 = vmatprep.subr.mxu0 %v551
  %1028 = vmatpush1.msra.mxu0 %v548
  %1029 = vmatprep.subr.mxu0 0.0
  %1030 = vmatpush1.msra.mxu0 0.0
  %1031 = vmatprep.subr.mxu0 0.0
  %1032 = vmatpush1.msra.mxu0 0.0
  %1033 = vmatprep.subr.mxu0 0.0
  %1034 = vmatpush1.msra.mxu0 0.0
  %1035 = vmatprep.subr.mxu0 0.0
  %1036 = vmatpush1.msra.mxu0 0.0
  %1037 = vmatprep.subr.mxu0 0.0
  %1038 = vmatpush1.msra.mxu0 0.0
  %1039 = vmatprep.subr.mxu0 0.0
  %1040 = vmatpush1.msra.mxu0 0.0
  %1041 = vmatprep.subr.mxu0 0.0
  %1042 = vmatpush1.msra.mxu0 0.0
  %1043 = vmatprep.subr.mxu0 0.0
  %1044 = vmatpush1.msra.mxu0 0.0
  %1045 = vmatprep.subr.mxu0 0.0
  %1046 = vmatpush1.msra.mxu0 0.0
  %1047 = vmatprep.subr.mxu0 0.0
  %1048 = vmatpush1.msra.mxu0 0.0
  %1049 = vmatprep.subr.mxu0 0.0
  %1050 = vmatpush1.msra.mxu0 0.0
  %1051 = vmatprep.subr.mxu0 0.0
  %1052 = vmatpush1.msra.mxu0 0.0
  %1053 = vmatprep.subr.mxu0 0.0
  %1054 = vmatpush1.msra.mxu0 0.0
  %1055 = vmatprep.subr.mxu0 0.0
  %1056 = vmatpush1.msra.mxu0 0.0
  %1057 = vmatprep.subr.mxu0 0.0
  %1058 = vmatpush1.msra.mxu0 0.0
  %1059 = vmatprep.subr.mxu0 0.0
  %1060 = vmatpush1.msra.mxu0 0.0
  %1061 = vmatprep.subr.mxu0 0.0
  %1062 = vmatpush1.msra.mxu0 0.0
  %1063 = vmatprep.subr.mxu0 0.0
  %1064 = vmatpush1.msra.mxu0 0.0
  %1065 = vmatprep.subr.mxu0 0.0
  %1066 = vmatpush1.msra.mxu0 0.0
  %1067 = vmatprep.subr.mxu0 0.0
  %1068 = vmatpush1.msra.mxu0 0.0
  %1069 = vmatprep.subr.mxu0 0.0
  %1070 = vmatpush1.msra.mxu0 0.0
  %1071 = vmatprep.subr.mxu0 0.0
  %1072 = vmatpush1.msra.mxu0 0.0
  %1073 = vmatprep.subr.mxu0 0.0
  %1074 = vmatpush1.msra.mxu0 0.0
  %1075 = vmatprep.subr.mxu0 0.0
  %1076 = vmatpush1.msra.mxu0 0.0
  %1077 = vmatprep.subr.mxu0 0.0
  %1078 = vmatpush1.msra.mxu0 0.0
  %1079 = vmatprep.subr.mxu0 0.0
  %1080 = vmatpush1.msra.mxu0 0.0
  %1081 = vmatprep.subr.mxu0 0.0
  %1082 = vmatpush1.msra.mxu0 0.0
  %1083 = vmatprep.subr.mxu0 0.0
  %1084 = vmatpush1.msra.mxu0 0.0
  %1085 = vmatprep.subr.mxu0 0.0
  %1086 = vmatpush1.msra.mxu0 0.0
  %1087 = vmatprep.subr.mxu0 0.0
  %1088 = vmatpush1.msra.mxu0 0.0
  %1089 = vmatprep.subr.mxu0 0.0
  %1090 = vmatpush1.msra.mxu0 0.0
  %1091 = vmatprep.mubr.f32.mxu0 0.0
  %1092 = vmatmul.mubr.f32.gmra.mrb[0].mxu0 %v1019
  %v1093 = vpop.f32.mrb[0].mxu0
  %v1094 = vadd.f32 0.0, %v1093
  %v1095 = vpop.f32.mrb[0].mxu0
  %v1096 = vadd.f32 0.0, %v1095
  %1097 = vdwg.mxu0
  %1098 = vmatprep.subr.mxu0 %v1025
  %1099 = vmatpush1.msra.mxu0 %v1022
  %1100 = vmatprep.subr.mxu0 0.0
  %1101 = vmatpush1.msra.mxu0 0.0
  %1102 = vmatprep.subr.mxu0 0.0
  %1103 = vmatpush1.msra.mxu0 0.0
  %1104 = vmatprep.subr.mxu0 0.0
  %1105 = vmatpush1.msra.mxu0 0.0
  %1106 = vmatprep.subr.mxu0 0.0
  %1107 = vmatpush1.msra.mxu0 0.0
  %1108 = vmatprep.subr.mxu0 0.0
  %1109 = vmatpush1.msra.mxu0 0.0
  %1110 = vmatprep.subr.mxu0 0.0
  %1111 = vmatpush1.msra.mxu0 0.0
  %1112 = vmatprep.subr.mxu0 0.0
  %1113 = vmatpush1.msra.mxu0 0.0
  %1114 = vmatprep.subr.mxu0 0.0
  %1115 = vmatpush1.msra.mxu0 0.0
  %1116 = vmatprep.subr.mxu0 0.0
  %1117 = vmatpush1.msra.mxu0 0.0
  %1118 = vmatprep.subr.mxu0 0.0
  %1119 = vmatpush1.msra.mxu0 0.0
  %1120 = vmatprep.subr.mxu0 0.0
  %1121 = vmatpush1.msra.mxu0 0.0
  %1122 = vmatprep.subr.mxu0 0.0
  %1123 = vmatpush1.msra.mxu0 0.0
  %1124 = vmatprep.subr.mxu0 0.0
  %1125 = vmatpush1.msra.mxu0 0.0
  %1126 = vmatprep.subr.mxu0 0.0
  %1127 = vmatpush1.msra.mxu0 0.0
  %1128 = vmatprep.subr.mxu0 0.0
  %1129 = vmatpush1.msra.mxu0 0.0
  %1130 = vmatprep.subr.mxu0 0.0
  %1131 = vmatpush1.msra.mxu0 0.0
  %1132 = vmatprep.subr.mxu0 0.0
  %1133 = vmatpush1.msra.mxu0 0.0
  %1134 = vmatprep.subr.mxu0 0.0
  %1135 = vmatpush1.msra.mxu0 0.0
  %1136 = vmatprep.subr.mxu0 0.0
  %1137 = vmatpush1.msra.mxu0 0.0
  %1138 = vmatprep.subr.mxu0 0.0
  %1139 = vmatpush1.msra.mxu0 0.0
  %1140 = vmatprep.subr.mxu0 0.0
  %1141 = vmatpush1.msra.mxu0 0.0
  %1142 = vmatprep.subr.mxu0 0.0
  %1143 = vmatpush1.msra.mxu0 0.0
  %1144 = vmatprep.subr.mxu0 0.0
  %1145 = vmatpush1.msra.mxu0 0.0
  %1146 = vmatprep.subr.mxu0 0.0
  %1147 = vmatpush1.msra.mxu0 0.0
  %1148 = vmatprep.subr.mxu0 0.0
  %1149 = vmatpush1.msra.mxu0 0.0
  %1150 = vmatprep.subr.mxu0 0.0
  %1151 = vmatpush1.msra.mxu0 0.0
  %1152 = vmatprep.subr.mxu0 0.0
  %1153 = vmatpush1.msra.mxu0 0.0
  %1154 = vmatprep.subr.mxu0 0.0
  %1155 = vmatpush1.msra.mxu0 0.0
  %1156 = vmatprep.subr.mxu0 0.0
  %1157 = vmatpush1.msra.mxu0 0.0
  %1158 = vmatprep.subr.mxu0 0.0
  %1159 = vmatpush1.msra.mxu0 0.0
  %1160 = vmatprep.subr.mxu0 0.0
  %1161 = vmatpush1.msra.mxu0 0.0
  %1162 = vmatprep.mubr.f32.mxu0 0.0
  %1163 = vmatmul.mubr.f32.gmra.mrb[0].mxu0 %v1019
  %v1164 = vpop.f32.mrb[0].mxu0
  %v1165 = vadd.f32 0.0, %v1164
  %v1166 = vpop.f32.mrb[0].mxu0
  %v1167 = vadd.f32 0.0, %v1166
  %1168 = vdwg.mxu0
  %v1169 = vadd.f32 %v1006, %v1094
  %v1170 = vadd.f32 %v1007, %v1096
  %v1171 = vadd.f32 %v1008, %v1165
  %v1172 = vadd.f32 %v1009, %v1167
  %1173 = vrot.lane.b32.xlu0 %v23, 120
  %v1174 = vpop.permute.xlu0 %1173
  %v1175 = vmul.f32 %v1174, %v36
  %s1176 = scalar_lea.vmem %s1, 28
  %v1177 = vld [vmem:[%s1176] sm:$0xf]
  %v1179 = vsel %vm66, %v1177, 0
  %v1182 = vsel %vm70, %v1175, 0
  %1184 = vmatprep.subr.mxu0 %v705
  %1185 = vmatpush1.msra.mxu0 %v551
  %1186 = vmatprep.subr.mxu0 0.0
  %1187 = vmatpush1.msra.mxu0 0.0
  %1188 = vmatprep.subr.mxu0 0.0
  %1189 = vmatpush1.msra.mxu0 0.0
  %1190 = vmatprep.subr.mxu0 0.0
  %1191 = vmatpush1.msra.mxu0 0.0
  %1192 = vmatprep.subr.mxu0 0.0
  %1193 = vmatpush1.msra.mxu0 0.0
  %1194 = vmatprep.subr.mxu0 0.0
  %1195 = vmatpush1.msra.mxu0 0.0
  %1196 = vmatprep.subr.mxu0 0.0
  %1197 = vmatpush1.msra.mxu0 0.0
  %1198 = vmatprep.subr.mxu0 0.0
  %1199 = vmatpush1.msra.mxu0 0.0
  %1200 = vmatprep.subr.mxu0 0.0
  %1201 = vmatpush1.msra.mxu0 0.0
  %1202 = vmatprep.subr.mxu0 0.0
  %1203 = vmatpush1.msra.mxu0 0.0
  %1204 = vmatprep.subr.mxu0 0.0
  %1205 = vmatpush1.msra.mxu0 0.0
  %1206 = vmatprep.subr.mxu0 0.0
  %1207 = vmatpush1.msra.mxu0 0.0
  %1208 = vmatprep.subr.mxu0 0.0
  %1209 = vmatpush1.msra.mxu0 0.0
  %1210 = vmatprep.subr.mxu0 0.0
  %1211 = vmatpush1.msra.mxu0 0.0
  %1212 = vmatprep.subr.mxu0 0.0
  %1213 = vmatpush1.msra.mxu0 0.0
  %1214 = vmatprep.subr.mxu0 0.0
  %1215 = vmatpush1.msra.mxu0 0.0
  %1216 = vmatprep.subr.mxu0 0.0
  %1217 = vmatpush1.msra.mxu0 0.0
  %1218 = vmatprep.subr.mxu0 0.0
  %1219 = vmatpush1.msra.mxu0 0.0
  %1220 = vmatprep.subr.mxu0 0.0
  %1221 = vmatpush1.msra.mxu0 0.0
  %1222 = vmatprep.subr.mxu0 0.0
  %1223 = vmatpush1.msra.mxu0 0.0
  %1224 = vmatprep.subr.mxu0 0.0
  %1225 = vmatpush1.msra.mxu0 0.0
  %1226 = vmatprep.subr.mxu0 0.0
  %1227 = vmatpush1.msra.mxu0 0.0
  %1228 = vmatprep.subr.mxu0 0.0
  %1229 = vmatpush1.msra.mxu0 0.0
  %1230 = vmatprep.subr.mxu0 0.0
  %1231 = vmatpush1.msra.mxu0 0.0
  %1232 = vmatprep.subr.mxu0 0.0
  %1233 = vmatpush1.msra.mxu0 0.0
  %1234 = vmatprep.subr.mxu0 0.0
  %1235 = vmatpush1.msra.mxu0 0.0
  %1236 = vmatprep.subr.mxu0 0.0
  %1237 = vmatpush1.msra.mxu0 0.0
  %1238 = vmatprep.subr.mxu0 0.0
  %1239 = vmatpush1.msra.mxu0 0.0
  %1240 = vmatprep.subr.mxu0 0.0
  %1241 = vmatpush1.msra.mxu0 0.0
  %1242 = vmatprep.subr.mxu0 0.0
  %1243 = vmatpush1.msra.mxu0 0.0
  %1244 = vmatprep.subr.mxu0 0.0
  %1245 = vmatpush1.msra.mxu0 0.0
  %1246 = vmatprep.subr.mxu0 0.0
  %1247 = vmatpush1.msra.mxu0 0.0
  %1248 = vmatprep.mubr.f32.mxu0 0.0
  %1249 = vmatmul.mubr.f32.gmra.mrb[0].mxu0 %v1179
  %v1250 = vpop.f32.mrb[0].mxu0
  %v1251 = vadd.f32 0.0, %v1250
  %v1252 = vpop.f32.mrb[0].mxu0
  %v1253 = vadd.f32 0.0, %v1252
  %1254 = vdwg.mxu0
  %1255 = vmatprep.subr.mxu0 %v1182
  %1256 = vmatpush1.msra.mxu0 %v1025
  %1257 = vmatprep.subr.mxu0 0.0
  %1258 = vmatpush1.msra.mxu0 0.0
  %1259 = vmatprep.subr.mxu0 0.0
  %1260 = vmatpush1.msra.mxu0 0.0
  %1261 = vmatprep.subr.mxu0 0.0
  %1262 = vmatpush1.msra.mxu0 0.0
  %1263 = vmatprep.subr.mxu0 0.0
  %1264 = vmatpush1.msra.mxu0 0.0
  %1265 = vmatprep.subr.mxu0 0.0
  %1266 = vmatpush1.msra.mxu0 0.0
  %1267 = vmatprep.subr.mxu0 0.0
  %1268 = vmatpush1.msra.mxu0 0.0
  %1269 = vmatprep.subr.mxu0 0.0
  %1270 = vmatpush1.msra.mxu0 0.0
  %1271 = vmatprep.subr.mxu0 0.0
  %1272 = vmatpush1.msra.mxu0 0.0
  %1273 = vmatprep.subr.mxu0 0.0
  %1274 = vmatpush1.msra.mxu0 0.0
  %1275 = vmatprep.subr.mxu0 0.0
  %1276 = vmatpush1.msra.mxu0 0.0
  %1277 = vmatprep.subr.mxu0 0.0
  %1278 = vmatpush1.msra.mxu0 0.0
  %1279 = vmatprep.subr.mxu0 0.0
  %1280 = vmatpush1.msra.mxu0 0.0
  %1281 = vmatprep.subr.mxu0 0.0
  %1282 = vmatpush1.msra.mxu0 0.0
  %1283 = vmatprep.subr.mxu0 0.0
  %1284 = vmatpush1.msra.mxu0 0.0
  %1285 = vmatprep.subr.mxu0 0.0
  %1286 = vmatpush1.msra.mxu0 0.0
  %1287 = vmatprep.subr.mxu0 0.0
  %1288 = vmatpush1.msra.mxu0 0.0
  %1289 = vmatprep.subr.mxu0 0.0
  %1290 = vmatpush1.msra.mxu0 0.0
  %1291 = vmatprep.subr.mxu0 0.0
  %1292 = vmatpush1.msra.mxu0 0.0
  %1293 = vmatprep.subr.mxu0 0.0
  %1294 = vmatpush1.msra.mxu0 0.0
  %1295 = vmatprep.subr.mxu0 0.0
  %1296 = vmatpush1.msra.mxu0 0.0
  %1297 = vmatprep.subr.mxu0 0.0
  %1298 = vmatpush1.msra.mxu0 0.0
  %1299 = vmatprep.subr.mxu0 0.0
  %1300 = vmatpush1.msra.mxu0 0.0
  %1301 = vmatprep.subr.mxu0 0.0
  %1302 = vmatpush1.msra.mxu0 0.0
  %1303 = vmatprep.subr.mxu0 0.0
  %1304 = vmatpush1.msra.mxu0 0.0
  %1305 = vmatprep.subr.mxu0 0.0
  %1306 = vmatpush1.msra.mxu0 0.0
  %1307 = vmatprep.subr.mxu0 0.0
  %1308 = vmatpush1.msra.mxu0 0.0
  %1309 = vmatprep.subr.mxu0 0.0
  %1310 = vmatpush1.msra.mxu0 0.0
  %1311 = vmatprep.subr.mxu0 0.0
  %1312 = vmatpush1.msra.mxu0 0.0
  %1313 = vmatprep.subr.mxu0 0.0
  %1314 = vmatpush1.msra.mxu0 0.0
  %1315 = vmatprep.subr.mxu0 0.0
  %1316 = vmatpush1.msra.mxu0 0.0
  %1317 = vmatprep.subr.mxu0 0.0
  %1318 = vmatpush1.msra.mxu0 0.0
  %1319 = vmatprep.mubr.f32.mxu0 0.0
  %1320 = vmatmul.mubr.f32.gmra.mrb[0].mxu0 %v1179
  %v1321 = vpop.f32.mrb[0].mxu0
  %v1322 = vadd.f32 0.0, %v1321
  %v1323 = vpop.f32.mrb[0].mxu0
  %v1324 = vadd.f32 0.0, %v1323
  %1325 = vdwg.mxu0
  %v1326 = vadd.f32 %v1169, %v1251
  %v1327 = vadd.f32 %v1170, %v1253
  %v1328 = vadd.f32 %v1171, %v1322
  %v1329 = vadd.f32 %v1172, %v1324
  %1330 = vrot.lane.b32.xlu0 %v21, 119
  %v1331 = vpop.permute.xlu0 %1330
  %v1332 = vmul.f32 %v1331, %v50
  %s1333 = scalar_lea.vmem %s1, 32
  %v1334 = vld [vmem:[%s1333] sm:$0xf]
  %v1336 = vsel %vm66, %v1334, 0
  %v1339 = vsel %vm70, %v1332, 0
  %1341 = vmatprep.subr.mxu0 %v862
  %1342 = vmatpush1.msra.mxu0 %v705
  %1343 = vmatprep.subr.mxu0 0.0
  %1344 = vmatpush1.msra.mxu0 0.0
  %1345 = vmatprep.subr.mxu0 0.0
  %1346 = vmatpush1.msra.mxu0 0.0
  %1347 = vmatprep.subr.mxu0 0.0
  %1348 = vmatpush1.msra.mxu0 0.0
  %1349 = vmatprep.subr.mxu0 0.0
  %1350 = vmatpush1.msra.mxu0 0.0
  %1351 = vmatprep.subr.mxu0 0.0
  %1352 = vmatpush1.msra.mxu0 0.0
  %1353 = vmatprep.subr.mxu0 0.0
  %1354 = vmatpush1.msra.mxu0 0.0
  %1355 = vmatprep.subr.mxu0 0.0
  %1356 = vmatpush1.msra.mxu0 0.0
  %1357 = vmatprep.subr.mxu0 0.0
  %1358 = vmatpush1.msra.mxu0 0.0
  %1359 = vmatprep.subr.mxu0 0.0
  %1360 = vmatpush1.msra.mxu0 0.0
  %1361 = vmatprep.subr.mxu0 0.0
  %1362 = vmatpush1.msra.mxu0 0.0
  %1363 = vmatprep.subr.mxu0 0.0
  %1364 = vmatpush1.msra.mxu0 0.0
  %1365 = vmatprep.subr.mxu0 0.0
  %1366 = vmatpush1.msra.mxu0 0.0
  %1367 = vmatprep.subr.mxu0 0.0
  %1368 = vmatpush1.msra.mxu0 0.0
  %1369 = vmatprep.subr.mxu0 0.0
  %1370 = vmatpush1.msra.mxu0 0.0
  %1371 = vmatprep.subr.mxu0 0.0
  %1372 = vmatpush1.msra.mxu0 0.0
  %1373 = vmatprep.subr.mxu0 0.0
  %1374 = vmatpush1.msra.mxu0 0.0
  %1375 = vmatprep.subr.mxu0 0.0
  %1376 = vmatpush1.msra.mxu0 0.0
  %1377 = vmatprep.subr.mxu0 0.0
  %1378 = vmatpush1.msra.mxu0 0.0
  %1379 = vmatprep.subr.mxu0 0.0
  %1380 = vmatpush1.msra.mxu0 0.0
  %1381 = vmatprep.subr.mxu0 0.0
  %1382 = vmatpush1.msra.mxu0 0.0
  %1383 = vmatprep.subr.mxu0 0.0
  %1384 = vmatpush1.msra.mxu0 0.0
  %1385 = vmatprep.subr.mxu0 0.0
  %1386 = vmatpush1.msra.mxu0 0.0
  %1387 = vmatprep.subr.mxu0 0.0
  %1388 = vmatpush1.msra.mxu0 0.0
  %1389 = vmatprep.subr.mxu0 0.0
  %1390 = vmatpush1.msra.mxu0 0.0
  %1391 = vmatprep.subr.mxu0 0.0
  %1392 = vmatpush1.msra.mxu0 0.0
  %1393 = vmatprep.subr.mxu0 0.0
  %1394 = vmatpush1.msra.mxu0 0.0
  %1395 = vmatprep.subr.mxu0 0.0
  %1396 = vmatpush1.msra.mxu0 0.0
  %1397 = vmatprep.subr.mxu0 0.0
  %1398 = vmatpush1.msra.mxu0 0.0
  %1399 = vmatprep.subr.mxu0 0.0
  %1400 = vmatpush1.msra.mxu0 0.0
  %1401 = vmatprep.subr.mxu0 0.0
  %1402 = vmatpush1.msra.mxu0 0.0
  %1403 = vmatprep.subr.mxu0 0.0
  %1404 = vmatpush1.msra.mxu0 0.0
  %1405 = vmatprep.mubr.f32.mxu0 0.0
  %1406 = vmatmul.mubr.f32.gmra.mrb[0].mxu0 %v1336
  %v1407 = vpop.f32.mrb[0].mxu0
  %v1408 = vadd.f32 0.0, %v1407
  %v1409 = vpop.f32.mrb[0].mxu0
  %v1410 = vadd.f32 0.0, %v1409
  %1411 = vdwg.mxu0
  %1412 = vmatprep.subr.mxu0 %v1339
  %1413 = vmatpush1.msra.mxu0 %v1182
  %1414 = vmatprep.subr.mxu0 0.0
  %1415 = vmatpush1.msra.mxu0 0.0
  %1416 = vmatprep.subr.mxu0 0.0
  %1417 = vmatpush1.msra.mxu0 0.0
  %1418 = vmatprep.subr.mxu0 0.0
  %1419 = vmatpush1.msra.mxu0 0.0
  %1420 = vmatprep.subr.mxu0 0.0
  %1421 = vmatpush1.msra.mxu0 0.0
  %1422 = vmatprep.subr.mxu0 0.0
  %1423 = vmatpush1.msra.mxu0 0.0
  %1424 = vmatprep.subr.mxu0 0.0
  %1425 = vmatpush1.msra.mxu0 0.0
  %1426 = vmatprep.subr.mxu0 0.0
  %1427 = vmatpush1.msra.mxu0 0.0
  %1428 = vmatprep.subr.mxu0 0.0
  %1429 = vmatpush1.msra.mxu0 0.0
  %1430 = vmatprep.subr.mxu0 0.0
  %1431 = vmatpush1.msra.mxu0 0.0
  %1432 = vmatprep.subr.mxu0 0.0
  %1433 = vmatpush1.msra.mxu0 0.0
  %1434 = vmatprep.subr.mxu0 0.0
  %1435 = vmatpush1.msra.mxu0 0.0
  %1436 = vmatprep.subr.mxu0 0.0
  %1437 = vmatpush1.msra.mxu0 0.0
  %1438 = vmatprep.subr.mxu0 0.0
  %1439 = vmatpush1.msra.mxu0 0.0
  %1440 = vmatprep.subr.mxu0 0.0
  %1441 = vmatpush1.msra.mxu0 0.0
  %1442 = vmatprep.subr.mxu0 0.0
  %1443 = vmatpush1.msra.mxu0 0.0
  %1444 = vmatprep.subr.mxu0 0.0
  %1445 = vmatpush1.msra.mxu0 0.0
  %1446 = vmatprep.subr.mxu0 0.0
  %1447 = vmatpush1.msra.mxu0 0.0
  %1448 = vmatprep.subr.mxu0 0.0
  %1449 = vmatpush1.msra.mxu0 0.0
  %1450 = vmatprep.subr.mxu0 0.0
  %1451 = vmatpush1.msra.mxu0 0.0
  %1452 = vmatprep.subr.mxu0 0.0
  %1453 = vmatpush1.msra.mxu0 0.0
  %1454 = vmatprep.subr.mxu0 0.0
  %1455 = vmatpush1.msra.mxu0 0.0
  %1456 = vmatprep.subr.mxu0 0.0
  %1457 = vmatpush1.msra.mxu0 0.0
  %1458 = vmatprep.subr.mxu0 0.0
  %1459 = vmatpush1.msra.mxu0 0.0
  %1460 = vmatprep.subr.mxu0 0.0
  %1461 = vmatpush1.msra.mxu0 0.0
  %1462 = vmatprep.subr.mxu0 0.0
  %1463 = vmatpush1.msra.mxu0 0.0
  %1464 = vmatprep.subr.mxu0 0.0
  %1465 = vmatpush1.msra.mxu0 0.0
  %1466 = vmatprep.subr.mxu0 0.0
  %1467 = vmatpush1.msra.mxu0 0.0
  %1468 = vmatprep.subr.mxu0 0.0
  %1469 = vmatpush1.msra.mxu0 0.0
  %1470 = vmatprep.subr.mxu0 0.0
  %1471 = vmatpush1.msra.mxu0 0.0
  %1472 = vmatprep.subr.mxu0 0.0
  %1473 = vmatpush1.msra.mxu0 0.0
  %1474 = vmatprep.subr.mxu0 0.0
  %1475 = vmatpush1.msra.mxu0 0.0
  %1476 = vmatprep.mubr.f32.mxu0 0.0
  %1477 = vmatmul.mubr.f32.gmra.mrb[0].mxu0 %v1336
  %v1478 = vpop.f32.mrb[0].mxu0
  %v1479 = vadd.f32 0.0, %v1478
  %v1480 = vpop.f32.mrb[0].mxu0
  %v1481 = vadd.f32 0.0, %v1480
  %1482 = vdwg.mxu0
  %v1483 = vadd.f32 %v1326, %v1408
  %v1484 = vadd.f32 %v1327, %v1410
  %v1485 = vadd.f32 %v1328, %v1479
  %v1486 = vadd.f32 %v1329, %v1481
  %s1487 = sld [smem:[#allocation2]]
  %vm1488 = vcmp.gt.f32.partialorder %v1483, 0.0
  %vm1489 = vcmp.gt.f32.partialorder %v1484, 0.0
  %vm1490 = vcmp.gt.f32.partialorder %v1485, 0.0
  %vm1491 = vcmp.gt.f32.partialorder %v1486, 0.0
  %v1492 = vstv %s1487
  %v1493 = vmul.f32 %v1492, %v1483
  %v1494 = vmul.f32 %v1492, %v1484
  %v1495 = vmul.f32 %v1492, %v1485
  %v1496 = vmul.f32 %v1492, %v1486
  %v1497 = vsel %vm1488, %v1483, %v1493
  %v1498 = vsel %vm1489, %v1484, %v1494
  %v1499 = vsel %vm1490, %v1485, %v1495
  %v1500 = vsel %vm1491, %v1486, %v1496
  %v1501 = vmul.f32 %v1500, %v46
  %1502 = vrot.lane.b32.xlu0 %v1500, 1
  %v1503 = vpop.permute.xlu0 %1502
  %v1504 = vmul.f32 %v1503, %v40
  %v1505 = vadd.f32 %v1501, %v1504
  %v1506 = vmul.f32 %v1497, 4.0
  %v1507 = vmul.f32 %v1498, %v46
  %1508 = vrot.lane.b32.xlu0 %v1498, 1
  %v1509 = vpop.permute.xlu0 %1508
  %v1510 = vmul.f32 %v1509, %v40
  %v1511 = vadd.f32 %v1507, %v1510
  %v1512 = vadd.f32 %v1511, %v1498
  %v1513 = vmul.f32 %v1512, 2.0
  %v1514 = vadd.f32 %v1506, %v1513
  %v1515 = vmul.f32 %v1499, %v45
  %1516 = vrot.lane.b32.xlu0 %v1499, 8
  %v1517 = vpop.permute.xlu0 %1516
  %v1518 = vmul.f32 %v1517, %v32
  %v1519 = vadd.f32 %v1515, %v1518
  %v1520 = vadd.f32 %v1519, %v1499
  %v1521 = vmul.f32 %v1520, 2.0
  %v1522 = vadd.f32 %v1514, %v1521
  %v1523 = vmul.f32 %v1505, %v45
  %1524 = vrot.lane.b32.xlu0 %v1505, 8
  %v1525 = vpop.permute.xlu0 %1524
  %v1526 = vmul.f32 %v1525, %v32
  %v1527 = vadd.f32 %v1523, %v1526
  %v1528 = vadd.f32 %v1522, %v1527
  %v1529 = vmul.f32 %v1500, %v45
  %1530 = vrot.lane.b32.xlu0 %v1500, 8
  %v1531 = vpop.permute.xlu0 %1530
  %v1532 = vmul.f32 %v1531, %v32
  %v1533 = vadd.f32 %v1529, %v1532
  %v1534 = vadd.f32 %v1528, %v1533
  %v1535 = vadd.f32 %v1534, %v1505
  %v1536 = vadd.f32 %v1535, %v1500
  %v1537 = vmul.f32 %v1536, 0.0625
  %v1538 = vld [vmem:[%s2] sm:$0xff]
  %v1540 = vsel %vm66, %v1538, 0
  %v1543 = vsel %vm70, %v1537, 0
  %1545 = vmatprep.subr.mxu0 0.0
  %1546 = vmatpush1.msra.mxu0 %v1543
  %1547 = vmatprep.subr.mxu0 0.0
  %1548 = vmatpush1.msra.mxu0 0.0
  %1549 = vmatprep.subr.mxu0 0.0
  %1550 = vmatpush1.msra.mxu0 0.0
  %1551 = vmatprep.subr.mxu0 0.0
  %1552 = vmatpush1.msra.mxu0 0.0
  %1553 = vmatprep.subr.mxu0 0.0
  %1554 = vmatpush1.msra.mxu0 0.0
  %1555 = vmatprep.subr.mxu0 0.0
  %1556 = vmatpush1.msra.mxu0 0.0
  %1557 = vmatprep.subr.mxu0 0.0
  %1558 = vmatpush1.msra.mxu0 0.0
  %1559 = vmatprep.subr.mxu0 0.0
  %1560 = vmatpush1.msra.mxu0 0.0
  %1561 = vmatprep.subr.mxu0 0.0
  %1562 = vmatpush1.msra.mxu0 0.0
  %1563 = vmatprep.subr.mxu0 0.0
  %1564 = vmatpush1.msra.mxu0 0.0
  %1565 = vmatprep.subr.mxu0 0.0
  %1566 = vmatpush1.msra.mxu0 0.0
  %1567 = vmatprep.subr.mxu0 0.0
  %1568 = vmatpush1.msra.mxu0 0.0
  %1569 = vmatprep.subr.mxu0 0.0
  %1570 = vmatpush1.msra.mxu0 0.0
  %1571 = vmatprep.subr.mxu0 0.0
  %1572 = vmatpush1.msra.mxu0 0.0
  %1573 = vmatprep.subr.mxu0 0.0
  %1574 = vmatpush1.msra.mxu0 0.0
  %1575 = vmatprep.subr.mxu0 0.0
  %1576 = vmatpush1.msra.mxu0 0.0
  %1577 = vmatprep.subr.mxu0 0.0
  %1578 = vmatpush1.msra.mxu0 0.0
  %1579 = vmatprep.subr.mxu0 0.0
  %1580 = vmatpush1.msra.mxu0 0.0
  %1581 = vmatprep.subr.mxu0 0.0
  %1582 = vmatpush1.msra.mxu0 0.0
  %1583 = vmatprep.subr.mxu0 0.0
  %1584 = vmatpush1.msra.mxu0 0.0
  %1585 = vmatprep.subr.mxu0 0.0
  %1586 = vmatpush1.msra.mxu0 0.0
  %1587 = vmatprep.subr.mxu0 0.0
  %1588 = vmatpush1.msra.mxu0 0.0
  %1589 = vmatprep.subr.mxu0 0.0
  %1590 = vmatpush1.msra.mxu0 0.0
  %1591 = vmatprep.subr.mxu0 0.0
  %1592 = vmatpush1.msra.mxu0 0.0
  %1593 = vmatprep.subr.mxu0 0.0
  %1594 = vmatpush1.msra.mxu0 0.0
  %1595 = vmatprep.subr.mxu0 0.0
  %1596 = vmatpush1.msra.mxu0 0.0
  %1597 = vmatprep.subr.mxu0 0.0
  %1598 = vmatpush1.msra.mxu0 0.0
  %1599 = vmatprep.subr.mxu0 0.0
  %1600 = vmatpush1.msra.mxu0 0.0
  %1601 = vmatprep.subr.mxu0 0.0
  %1602 = vmatpush1.msra.mxu0 0.0
  %1603 = vmatprep.subr.mxu0 0.0
  %1604 = vmatpush1.msra.mxu0 0.0
  %1605 = vmatprep.subr.mxu0 0.0
  %1606 = vmatpush1.msra.mxu0 0.0
  %1607 = vmatprep.subr.mxu0 0.0
  %1608 = vmatpush1.msra.mxu0 0.0
  %1609 = vmatprep.mubr.f32.mxu0 0.0
  %1610 = vmatmul.mubr.f32.gmra.mrb[0].mxu0 %v1540
  %v1611 = vpop.f32.mrb[0].mxu0
  %v1612 = vadd.f32 0.0, %v1611
  %v1613 = vpop.f32.mrb[0].mxu0
  %1614 = vdwg.mxu0
  %1615 = vst [vmem:[%s5] sm:$0xff] %v1612
  // Predicated region
  $region22: #{downsample_forward.1} parent=0 // pred_check
    _
  $region23: #{downsample_forward.1} parent=0 // pred_check_branch
    %1617 = sbr.rel (0) target = $region25
  $region24: #{downsample_forward.1} parent=0 // pred_region
    _
  $region25: #{downsample_forward.1} parent=0 // pred_fallthru
    _
  // Predicated region
  $region26: #{downsample_forward.1} parent=0 // pred_check
    _
  $region27: #{downsample_forward.1} parent=0 // pred_check_branch
    %1619 = sbr.rel (0) target = $region29
  $region28: #{downsample_forward.1} parent=0 // pred_region
    _
  $region29: #{downsample_forward.1} parent=0 // pred_fallthru
    _

</llo_original>
